<compile_context>
chip_gen: v6e
topology: v6e:2x2x1
jax: 0.10.0
libtpu: 0.0.40
codegen_flags: <defaults>
</compile_context>

<pallas_src>
import math
import functools

import jax
import jax.numpy as jnp
from jax import lax
from jax.experimental import pallas as pl
from jax.experimental.pallas import tpu as pltpu

F32 = jnp.float32
BF16 = jnp.bfloat16


# ---------------------------------------------------------------------------
# Helpers
# ---------------------------------------------------------------------------

def _vmem_limit_bytes():
    """Generation-aware VMEM request: ~3/4 of physical, capped at 100 MiB.

    v7x (64 MiB physical) -> ~48 MiB; v5e/v6e (128 MiB) -> ~96 MiB.
    """
    cap = None
    try:
        cap = int(pltpu.get_tpu_info().vmem_capacity_bytes)
    except Exception:
        cap = None
    if not cap or cap <= 0:
        cap = 128 * 1024 * 1024
    return min((cap * 3) // 4, 100 * 1024 * 1024)


def _cparams(semantics):
    return pltpu.CompilerParams(
        dimension_semantics=semantics,
        vmem_limit_bytes=_vmem_limit_bytes(),
    )


def _row_tile(m, target=512):
    """Largest tile <= target that divides m and is a multiple of 8 (else m)."""
    if m <= target:
        return m
    t = target - (target % 8)
    while t >= 8:
        if m % t == 0:
            return t
        t -= 8
    return m


def _ff_tile(dff, target=2048):
    """Largest multiple of 128 <= target that divides dff (else dff itself)."""
    if dff <= target:
        return dff
    t = target - (target % 128)
    while t >= 128:
        if dff % t == 0:
            return t
        t -= 128
    return dff


def _layernorm(x, g, b):
    mu = jnp.mean(x, axis=-1, keepdims=True)
    var = jnp.mean((x - mu) * (x - mu), axis=-1, keepdims=True)
    return (x - mu) * lax.rsqrt(var + 1e-5) * g + b


def _mm(a, w):
    """bf16 MXU matmul with f32 accumulation (w is already bf16)."""
    return jnp.dot(a.astype(BF16), w, preferred_element_type=F32)


def _gru_gate(x, y, wrzg, urz, ug, bg, E):
    """GTrXL gating.  x: residual stream (f32).  y: relu'd sublayer output (f32)."""
    wy = _mm(y, wrzg)                       # (rows, 3E) = [y@Wr | y@Wz | y@Wg]
    ux = _mm(x, urz)                        # (rows, 2E) = [x@Ur | x@Uz]
    r = jax.nn.sigmoid(wy[:, :E] + ux[:, :E])
    z = jax.nn.sigmoid(wy[:, E:2 * E] + ux[:, E:2 * E] - bg)
    h = jnp.tanh(wy[:, 2 * E:] + _mm(r * x, ug))
    return (1.0 - z) * x + z * h


def _attention(q, k, v, ctx_ref, nhead, scale):
    """Per-head softmax attention; context heads written into a (S,E) VMEM scratch."""
    E = q.shape[-1]
    dh = E // nhead
    qb = (q * scale).astype(BF16)           # scale folded into q once, before the loop
    kb = k.astype(BF16)
    vb = v.astype(BF16)
    dn = (((1,), (1,)), ((), ()))           # contract head dim; no transposed slice
    for h in range(nhead):
        lo, hi = h * dh, (h + 1) * dh
        s = lax.dot_general(qb[:, lo:hi], kb[:, lo:hi], dn,
                            preferred_element_type=F32)            # (S, Skv) f32
        m = jnp.max(s, axis=-1, keepdims=True)
        p = jnp.exp(s - m)
        p = p * pl.reciprocal(jnp.sum(p, axis=-1, keepdims=True), approx=True)
        ctx_ref[:, lo:hi] = jnp.dot(p.astype(BF16), vb[:, lo:hi],
                                    preferred_element_type=F32)     # (S, dh)
    return ctx_ref[...]


# ---------------------------------------------------------------------------
# Pallas kernels (one fused kernel per sublayer)
# ---------------------------------------------------------------------------

def _self_attn_block_kernel(x_ref, g1_ref, b1_ref,
                            wqkv_ref, bqkv_ref, wo_ref, bo_ref,
                            wrzg_ref, urz_ref, ug_ref, bg_ref,
                            o_ref, ctx_ref, *, nhead):
    """LN1 -> fused QKV -> multi-head self-attn -> out-proj -> ReLU -> GRU gate."""
    E = x_ref.shape[-1]
    scale = 1.0 / math.sqrt(E // nhead)
    x = x_ref[0]                                            # (S, E) f32
    y = _layernorm(x, g1_ref[...], b1_ref[...])
    qkv = _mm(y, wqkv_ref[...]) + bqkv_ref[...]             # (S, 3E) one wide matmul
    ctx = _attention(qkv[:, :E], qkv[:, E:2 * E], qkv[:, 2 * E:],
                     ctx_ref, nhead, scale)
    attn = _mm(ctx, wo_ref[...]) + bo_ref[...]              # (S, E)
    ya = jnp.maximum(attn, 0.0)                             # F.relu(dropout1(.)) eval-mode
    o_ref[0] = _gru_gate(x, ya, wrzg_ref[...], urz_ref[...], ug_ref[...],
                         bg_ref[...], E)


def _cross_attn_block_kernel(x_ref, mem_ref, g2_ref, b2_ref,
                             wq_ref, bq_ref, wkv_ref, bkv_ref, wo_ref, bo_ref,
                             wrzg_ref, urz_ref, ug_ref, bg_ref,
                             o_ref, ctx_ref, *, nhead):
    """LN2 -> Q proj + memory KV proj (fused, per batch) -> attn -> out-proj -> ReLU -> gate."""
    E = x_ref.shape[-1]
    scale = 1.0 / math.sqrt(E // nhead)
    x = x_ref[0]                                            # (S,  E)
    mem = mem_ref[0]                                        # (Sm, E)
    y = _layernorm(x, g2_ref[...], b2_ref[...])
    q = _mm(y, wq_ref[...]) + bq_ref[...]                   # (S,  E)
    kv = _mm(mem, wkv_ref[...]) + bkv_ref[...]              # (Sm, 2E) one wide matmul
    ctx = _attention(q, kv[:, :E], kv[:, E:], ctx_ref, nhead, scale)
    attn = _mm(ctx, wo_ref[...]) + bo_ref[...]
    ya = jnp.maximum(attn, 0.0)                             # F.relu(dropout2(.)) eval-mode
    o_ref[0] = _gru_gate(x, ya, wrzg_ref[...], urz_ref[...], ug_ref[...],
                         bg_ref[...], E)


def _ffn_gate_kernel(x_ref, g3_ref, b3_ref,
                     w1_ref, b1_ref, w2_ref, b2_ref,
                     wrzg_ref, urz_ref, ug_ref, bg_ref,
                     o_ref, acc_ref):
    """LN3 -> FFN (DFF-tiled with f32 accumulator) -> ReLU -> GRU gate."""
    E = x_ref.shape[-1]
    j = pl.program_id(1)

    @pl.when(j == 0)
    def _():
        acc_ref[...] = jnp.zeros_like(acc_ref)

    x = x_ref[...]                                          # (tm, E) f32
    y = _layernorm(x, g3_ref[...], b3_ref[...])
    h = jnp.maximum(_mm(y, w1_ref[...]) + b1_ref[...], 0.0)  # (tm, tdff)
    acc_ref[...] += _mm(h, w2_ref[...])                      # partial (tm, E)

    @pl.when(j == pl.num_programs(1) - 1)
    def _():
        f = acc_ref[...] + b2_ref[...]
        ya = jnp.maximum(f, 0.0)                            # F.relu(dropout3(.)) eval-mode
        o_ref[...] = _gru_gate(x, ya, wrzg_ref[...], urz_ref[...], ug_ref[...],
                               bg_ref[...], E)


# ---------------------------------------------------------------------------
# pallas_call wrappers
# ---------------------------------------------------------------------------

def self_attn_sublayer(x3d, gamma, beta, attn_p, gate_p, nhead):
    B, S, E = x3d.shape
    blk = pl.BlockSpec((1, S, E), lambda b: (b, 0, 0))
    vec_e = pl.BlockSpec((1, E), lambda b: (0, 0))
    # TODO(synk): add an S-tile grid axis (flash-style) for long sequences / v7x occupancy.
    return pl.pallas_call(
        functools.partial(_self_attn_block_kernel, nhead=nhead),
        out_shape=jax.ShapeDtypeStruct((B, S, E), F32),
        grid=(B,),
        in_specs=[blk, vec_e, vec_e,
                  pl.BlockSpec((E, 3 * E), lambda b: (0, 0)),
                  pl.BlockSpec((1, 3 * E), lambda b: (0, 0)),
                  pl.BlockSpec((E, E), lambda b: (0, 0)), vec_e,
                  pl.BlockSpec((E, 3 * E), lambda b: (0, 0)),
                  pl.BlockSpec((E, 2 * E), lambda b: (0, 0)),
                  pl.BlockSpec((E, E), lambda b: (0, 0)), vec_e],
        out_specs=blk,
        scratch_shapes=[pltpu.VMEM((S, E), F32)],
        compiler_params=_cparams(("parallel",)),
    )(x3d, gamma, beta,
      attn_p["wqkv"], attn_p["bqkv"], attn_p["wo"], attn_p["bo"],
      gate_p["wrzg"], gate_p["urz"], gate_p["ug"], gate_p["bg"])


def cross_attn_sublayer(x3d, mem3d, gamma, beta, attn_p, gate_p, nhead):
    B, S, E = x3d.shape
    Sm = mem3d.shape[1]
    blk_x = pl.BlockSpec((1, S, E), lambda b: (b, 0, 0))
    blk_m = pl.BlockSpec((1, Sm, E), lambda b: (b, 0, 0))
    vec_e = pl.BlockSpec((1, E), lambda b: (0, 0))
    return pl.pallas_call(
        functools.partial(_cross_attn_block_kernel, nhead=nhead),
        out_shape=jax.ShapeDtypeStruct((B, S, E), F32),
        grid=(B,),
        in_specs=[blk_x, blk_m, vec_e, vec_e,
                  pl.BlockSpec((E, E), lambda b: (0, 0)), vec_e,
                  pl.BlockSpec((E, 2 * E), lambda b: (0, 0)),
                  pl.BlockSpec((1, 2 * E), lambda b: (0, 0)),
                  pl.BlockSpec((E, E), lambda b: (0, 0)), vec_e,
                  pl.BlockSpec((E, 3 * E), lambda b: (0, 0)),
                  pl.BlockSpec((E, 2 * E), lambda b: (0, 0)),
                  pl.BlockSpec((E, E), lambda b: (0, 0)), vec_e],
        out_specs=blk_x,
        scratch_shapes=[pltpu.VMEM((S, E), F32)],
        compiler_params=_cparams(("parallel",)),
    )(x3d, mem3d, gamma, beta,
      attn_p["wq"], attn_p["bq"], attn_p["wkv"], attn_p["bkv"],
      attn_p["wo"], attn_p["bo"],
      gate_p["wrzg"], gate_p["urz"], gate_p["ug"], gate_p["bg"])


def ffn_gate_sublayer(x2d, gamma, beta, ff_p, gate_p):
    M, E = x2d.shape
    DFF = ff_p["w1"].shape[1]
    tm = _row_tile(M)
    tdff = _ff_tile(DFF)
    row = pl.BlockSpec((tm, E), lambda i, j: (i, 0))
    vec_e = pl.BlockSpec((1, E), lambda i, j: (0, 0))
    # TODO(synk): weight specs are grid-invariant; single-buffering them (pl.Buffered(1))
    # would halve their VMEM footprint once verified safe on all generations.
    return pl.pallas_call(
        _ffn_gate_kernel,
        out_shape=jax.ShapeDtypeStruct((M, E), F32),
        grid=(M // tm, DFF // tdff),
        in_specs=[row, vec_e, vec_e,
                  pl.BlockSpec((E, tdff), lambda i, j: (0, j)),
                  pl.BlockSpec((1, tdff), lambda i, j: (0, j)),
                  pl.BlockSpec((tdff, E), lambda i, j: (j, 0)),
                  vec_e,
                  pl.BlockSpec((E, 3 * E), lambda i, j: (0, 0)),
                  pl.BlockSpec((E, 2 * E), lambda i, j: (0, 0)),
                  pl.BlockSpec((E, E), lambda i, j: (0, 0)),
                  vec_e],
        out_specs=row,
        scratch_shapes=[pltpu.VMEM((tm, E), F32)],
        compiler_params=_cparams(("parallel", "arbitrary")),
    )(x2d, gamma, beta,
      ff_p["w1"], ff_p["b1"], ff_p["w2"], ff_p["b2"],
      gate_p["wrzg"], gate_p["urz"], gate_p["ug"], gate_p["bg"])


# ---------------------------------------------------------------------------
# Decoder layer (glue in plain JAX: one layout transpose in, one out)
# ---------------------------------------------------------------------------

def transformer_decoder_layer(trg, memory, packed, nhead):
    S, B, E = trg.shape
    # TODO(synk): fold the (S,B,E)<->(B,S,E) layout change into the attention BlockSpecs
    # (block (S,1,E) indexed by batch) to avoid the XLA transposes entirely.
    x3d = trg.transpose(1, 0, 2)                    # (B, S,  E)
    mem3d = memory.transpose(1, 0, 2)               # (B, Sm, E)

    # sublayer 1: LN1 -> self-attn -> out-proj -> ReLU -> GRU gate (one fused kernel)
    x3d = self_attn_sublayer(x3d, packed["norm1_g"], packed["norm1_b"],
                             packed["self_attn"], packed["gate_mha"], nhead)

    # sublayer 2: LN2 -> cross-attn over memory -> out-proj -> ReLU -> GRU gate (one fused kernel)
    x3d = cross_attn_sublayer(x3d, mem3d, packed["norm2_g"], packed["norm2_b"],
                              packed["cross_attn"], packed["gate_mha2"], nhead)

    # sublayer 3: LN3 -> FFN -> ReLU -> GRU gate (one fused kernel, DFF-tiled)
    x2d = ffn_gate_sublayer(x3d.reshape(B * S, E), packed["norm3_g"], packed["norm3_b"],
                            packed["ff"], packed["gate_mlp"])

    return x2d.reshape(B, S, E).transpose(1, 0, 2)


# ---------------------------------------------------------------------------
# Deterministic parameter construction + packing (concat + bf16 cast, done once)
# ---------------------------------------------------------------------------

def _dense(key, fan_in, fan_out):
    kw, kb = jax.random.split(key)
    bound = 1.0 / math.sqrt(fan_in)
    w = jax.random.uniform(kw, (fan_in, fan_out), F32, -bound, bound)
    b = jax.random.uniform(kb, (fan_out,), F32, -bound, bound)
    return w, b


def _attn_params(keys, E):
    wq, bq = _dense(keys[0], E, E)
    wk, bk = _dense(keys[1], E, E)
    wv, bv = _dense(keys[2], E, E)
    wo, bo = _dense(keys[3], E, E)
    return dict(wq=wq, bq=bq, wk=wk, bk=bk, wv=wv, bv=bv, wo=wo, bo=bo)


def _gate_params(keys, E):
    bound = 1.0 / math.sqrt(E)
    names = ["wr", "ur", "wz", "uz", "wg", "ug"]
    p = {n: jax.random.uniform(k, (E, E), F32, -bound, bound)
         for n, k in zip(names, keys)}
    p["bg"] = jnp.full((E,), 2.0, F32)   # GTrXL gate-bias init
    return p


def init_params(key, E, dff):
    keys = jax.random.split(key, 32)
    params = {
        "self_attn": _attn_params(keys[0:4], E),
        "cross_attn": _attn_params(keys[4:8], E),
        "gate_mha": _gate_params(keys[8:14], E),
        "gate_mha2": _gate_params(keys[14:20], E),
        "gate_mlp": _gate_params(keys[20:26], E),
        "norm1_g": jnp.ones((E,), F32), "norm1_b": jnp.zeros((E,), F32),
        "norm2_g": jnp.ones((E,), F32), "norm2_b": jnp.zeros((E,), F32),
        "norm3_g": jnp.ones((E,), F32), "norm3_b": jnp.zeros((E,), F32),
    }
    w1, b1 = _dense(keys[26], E, dff)
    w2, b2 = _dense(keys[27], dff, E)
    params["ff"] = dict(w1=w1, b1=b1, w2=w2, b2=b2)
    return params


def _pack_self_attn(p, E):
    return dict(
        wqkv=jnp.concatenate([p["wq"], p["wk"], p["wv"]], axis=1).astype(BF16),
        bqkv=jnp.concatenate([p["bq"], p["bk"], p["bv"]]).reshape(1, 3 * E),
        wo=p["wo"].astype(BF16), bo=p["bo"].reshape(1, E))


def _pack_cross_attn(p, E):
    return dict(
        wq=p["wq"].astype(BF16), bq=p["bq"].reshape(1, E),
        wkv=jnp.concatenate([p["wk"], p["wv"]], axis=1).astype(BF16),
        bkv=jnp.concatenate([p["bk"], p["bv"]]).reshape(1, 2 * E),
        wo=p["wo"].astype(BF16), bo=p["bo"].reshape(1, E))


def _pack_gate(p, E):
    return dict(
        wrzg=jnp.concatenate([p["wr"], p["wz"], p["wg"]], axis=1).astype(BF16),
        urz=jnp.concatenate([p["ur"], p["uz"]], axis=1).astype(BF16),
        ug=p["ug"].astype(BF16),
        bg=p["bg"].reshape(1, E))


def pack_params(params, E):
    return dict(
        self_attn=_pack_self_attn(params["self_attn"], E),
        cross_attn=_pack_cross_attn(params["cross_attn"], E),
        gate_mha=_pack_gate(params["gate_mha"], E),
        gate_mha2=_pack_gate(params["gate_mha2"], E),
        gate_mlp=_pack_gate(params["gate_mlp"], E),
        ff=dict(w1=params["ff"]["w1"].astype(BF16),
                b1=params["ff"]["b1"].reshape(1, -1),
                w2=params["ff"]["w2"].astype(BF16),
                b2=params["ff"]["b2"].reshape(1, -1)),
        norm1_g=params["norm1_g"].reshape(1, E), norm1_b=params["norm1_b"].reshape(1, E),
        norm2_g=params["norm2_g"].reshape(1, E), norm2_b=params["norm2_b"].reshape(1, E),
        norm3_g=params["norm3_g"].reshape(1, E), norm3_b=params["norm3_b"].reshape(1, E),
    )


# ---------------------------------------------------------------------------

if __name__ == "__main__":
    S, S_MEM, B, E, H, DFF = 8, 12, 2, 32, 4, 64

    root = jax.random.PRNGKey(0)
    k_params, k_trg, k_mem = jax.random.split(root, 3)

    params = init_params(k_params, E, DFF)
    packed = pack_params(params, E)
    trg = jax.random.normal(k_trg, (S, B, E), F32)
    memory = jax.random.normal(k_mem, (S_MEM, B, E), F32)

    out = transformer_decoder_layer(trg, memory, packed, nhead=H)
    out = jax.block_until_ready(out)
    assert out.shape == (S, B, E) and bool(jnp.all(jnp.isfinite(out)))
    print("KERNEL_OK")
</pallas_src>

<mosaic_0001>
module attributes {stable_mosaic.version = 11 : i64} {
  func.func @_self_attn_block_kernel(%arg0: i32, %arg1: memref<1x8x32xf32, #tpu.memory_space<vmem>>, %arg2: memref<1x32xf32, #tpu.memory_space<vmem>>, %arg3: memref<1x32xf32, #tpu.memory_space<vmem>>, %arg4: memref<32x96xbf16, #tpu.memory_space<vmem>>, %arg5: memref<1x96xf32, #tpu.memory_space<vmem>>, %arg6: memref<32x32xbf16, #tpu.memory_space<vmem>>, %arg7: memref<1x32xf32, #tpu.memory_space<vmem>>, %arg8: memref<32x96xbf16, #tpu.memory_space<vmem>>, %arg9: memref<32x64xbf16, #tpu.memory_space<vmem>>, %arg10: memref<32x32xbf16, #tpu.memory_space<vmem>>, %arg11: memref<1x32xf32, #tpu.memory_space<vmem>>, %arg12: memref<1x8x32xf32, #tpu.memory_space<vmem>>, %arg13: memref<8x32xf32, #tpu.memory_space<vmem>>) attributes {dimension_semantics = [#tpu.dimension_semantics<parallel>], iteration_bounds = array<i64: 2>, scalar_prefetch = 0 : i64, scratch_operands = 1 : i64, tpu.core_type = #tpu.core_type<tc>, window_params = [{transform_indices = @transform_0, window_bounds = array<i64: 1, 8, 32>}, {pipeline_mode = #tpu.pipeline_mode<synchronous>, transform_indices = @transform_1, window_bounds = array<i64: 1, 32>}, {pipeline_mode = #tpu.pipeline_mode<synchronous>, transform_indices = @transform_2, window_bounds = array<i64: 1, 32>}, {pipeline_mode = #tpu.pipeline_mode<synchronous>, transform_indices = @transform_3, window_bounds = array<i64: 32, 96>}, {pipeline_mode = #tpu.pipeline_mode<synchronous>, transform_indices = @transform_4, window_bounds = array<i64: 1, 96>}, {pipeline_mode = #tpu.pipeline_mode<synchronous>, transform_indices = @transform_5, window_bounds = array<i64: 32, 32>}, {pipeline_mode = #tpu.pipeline_mode<synchronous>, transform_indices = @transform_6, window_bounds = array<i64: 1, 32>}, {pipeline_mode = #tpu.pipeline_mode<synchronous>, transform_indices = @transform_7, window_bounds = array<i64: 32, 96>}, {pipeline_mode = #tpu.pipeline_mode<synchronous>, transform_indices = @transform_8, window_bounds = array<i64: 32, 64>}, {pipeline_mode = #tpu.pipeline_mode<synchronous>, transform_indices = @transform_9, window_bounds = array<i64: 32, 32>}, {pipeline_mode = #tpu.pipeline_mode<synchronous>, transform_indices = @transform_10, window_bounds = array<i64: 1, 32>}, {transform_indices = @transform_11, window_bounds = array<i64: 1, 8, 32>}]} {
    %c0 = arith.constant 0 : index
    %c0_0 = arith.constant 0 : index
    %c0_1 = arith.constant 0 : index
    %0 = vector.load %arg1[%c0, %c0_0, %c0_1] : memref<1x8x32xf32, #tpu.memory_space<vmem>>, vector<1x8x32xf32>
    %1 = vector.shape_cast %0 : vector<1x8x32xf32> to vector<8x32xf32>
    %c0_2 = arith.constant 0 : index
    %c0_3 = arith.constant 0 : index
    %2 = vector.load %arg2[%c0_2, %c0_3] : memref<1x32xf32, #tpu.memory_space<vmem>>, vector<1x32xf32>
    %c0_4 = arith.constant 0 : index
    %c0_5 = arith.constant 0 : index
    %3 = vector.load %arg3[%c0_4, %c0_5] : memref<1x32xf32, #tpu.memory_space<vmem>>, vector<1x32xf32>
    %cst = arith.constant dense<0.000000e+00> : vector<8xf32>
    %4 = vector.multi_reduction <add>, %1, %cst [1] : vector<8x32xf32> to vector<8xf32>
    %5 = vector.shape_cast %4 : vector<8xf32> to vector<8x1xf32>
    %cst_6 = arith.constant 3.200000e+01 : f32
    %6 = vector.broadcast %cst_6 : f32 to vector<8x1xf32>
    %7 = arith.divf %5, %6 : vector<8x1xf32>
    %8 = vector.broadcast %7 : vector<8x1xf32> to vector<8x32xf32>
    %9 = arith.subf %1, %8 : vector<8x32xf32>
    %10 = vector.broadcast %7 : vector<8x1xf32> to vector<8x32xf32>
    %11 = arith.subf %1, %10 : vector<8x32xf32>
    %12 = arith.mulf %9, %11 : vector<8x32xf32>
    %cst_7 = arith.constant dense<0.000000e+00> : vector<8xf32>
    %13 = vector.multi_reduction <add>, %12, %cst_7 [1] : vector<8x32xf32> to vector<8xf32>
    %14 = vector.shape_cast %13 : vector<8xf32> to vector<8x1xf32>
    %cst_8 = arith.constant 3.200000e+01 : f32
    %15 = vector.broadcast %cst_8 : f32 to vector<8x1xf32>
    %16 = arith.divf %14, %15 : vector<8x1xf32>
    %17 = vector.broadcast %7 : vector<8x1xf32> to vector<8x32xf32>
    %18 = arith.subf %1, %17 : vector<8x32xf32>
    %cst_9 = arith.constant 9.99999974E-6 : f32
    %19 = vector.broadcast %cst_9 : f32 to vector<8x1xf32>
    %20 = arith.addf %16, %19 : vector<8x1xf32>
    %21 = math.rsqrt %20 : vector<8x1xf32>
    %22 = vector.broadcast %21 : vector<8x1xf32> to vector<8x32xf32>
    %23 = arith.mulf %18, %22 : vector<8x32xf32>
    %24 = vector.broadcast %2 : vector<1x32xf32> to vector<8x32xf32>
    %25 = arith.mulf %23, %24 : vector<8x32xf32>
    %26 = vector.broadcast %3 : vector<1x32xf32> to vector<8x32xf32>
    %27 = arith.addf %25, %26 : vector<8x32xf32>
    %c0_10 = arith.constant 0 : index
    %c0_11 = arith.constant 0 : index
    %28 = vector.load %arg4[%c0_10, %c0_11] : memref<32x96xbf16, #tpu.memory_space<vmem>>, vector<32x96xbf16>
    %29 = arith.truncf %27 : vector<8x32xf32> to vector<8x32xbf16>
    %cst_12 = arith.constant dense<0.000000e+00> : vector<8x96xf32>
    %30 = tpu.matmul %29, %28, %cst_12 {dimension_numbers = #tpu.dot_dimension_numbers<[1], [0], [0], [1], [0, 0, 1, 1], [], []>} : vector<8x32xbf16>, vector<32x96xbf16>, vector<8x96xf32> -> vector<8x96xf32>
    %c0_13 = arith.constant 0 : index
    %c0_14 = arith.constant 0 : index
    %31 = vector.load %arg5[%c0_13, %c0_14] : memref<1x96xf32, #tpu.memory_space<vmem>>, vector<1x96xf32>
    %32 = vector.broadcast %31 : vector<1x96xf32> to vector<8x96xf32>
    %33 = arith.addf %30, %32 : vector<8x96xf32>
    %34 = vector.extract_strided_slice %33 {offsets = [0, 0], sizes = [8, 32], strides = [1, 1]} : vector<8x96xf32> to vector<8x32xf32>
    %35 = vector.extract_strided_slice %33 {offsets = [0, 32], sizes = [8, 32], strides = [1, 1]} : vector<8x96xf32> to vector<8x32xf32>
    %36 = vector.extract_strided_slice %33 {offsets = [0, 64], sizes = [8, 32], strides = [1, 1]} : vector<8x96xf32> to vector<8x32xf32>
    %cst_15 = arith.constant 0.353553385 : f32
    %37 = vector.broadcast %cst_15 : f32 to vector<8x32xf32>
    %38 = arith.mulf %34, %37 : vector<8x32xf32>
    %39 = arith.truncf %38 : vector<8x32xf32> to vector<8x32xbf16>
    %40 = arith.truncf %35 : vector<8x32xf32> to vector<8x32xbf16>
    %41 = arith.truncf %36 : vector<8x32xf32> to vector<8x32xbf16>
    %42 = vector.extract_strided_slice %39 {offsets = [0, 0], sizes = [8, 8], strides = [1, 1]} : vector<8x32xbf16> to vector<8x8xbf16>
    %43 = vector.extract_strided_slice %40 {offsets = [0, 0], sizes = [8, 8], strides = [1, 1]} : vector<8x32xbf16> to vector<8x8xbf16>
    %cst_16 = arith.constant dense<0.000000e+00> : vector<8x8xf32>
    %44 = tpu.matmul %42, %43, %cst_16 {dimension_numbers = #tpu.dot_dimension_numbers<[1], [1], [0], [0], [0, 0, 1, 0], [], []>} : vector<8x8xbf16>, vector<8x8xbf16>, vector<8x8xf32> -> vector<8x8xf32>
    %cst_17 = arith.constant dense<0xFF800000> : vector<8xf32>
    %45 = vector.multi_reduction <maximumf>, %44, %cst_17 [1] : vector<8x8xf32> to vector<8xf32>
    %46 = vector.shape_cast %45 : vector<8xf32> to vector<8x1xf32>
    %47 = vector.broadcast %46 : vector<8x1xf32> to vector<8x8xf32>
    %48 = arith.subf %44, %47 : vector<8x8xf32>
    %49 = math.exp %48 : vector<8x8xf32>
    %cst_18 = arith.constant dense<0.000000e+00> : vector<8xf32>
    %50 = vector.multi_reduction <add>, %49, %cst_18 [1] : vector<8x8xf32> to vector<8xf32>
    %51 = vector.shape_cast %50 : vector<8xf32> to vector<8x1xf32>
    %52 = tpu.reciprocal %51 {approx = true} : vector<8x1xf32> -> vector<8x1xf32>
    %53 = vector.broadcast %52 : vector<8x1xf32> to vector<8x8xf32>
    %54 = arith.mulf %49, %53 : vector<8x8xf32>
    %55 = arith.truncf %54 : vector<8x8xf32> to vector<8x8xbf16>
    %56 = vector.extract_strided_slice %41 {offsets = [0, 0], sizes = [8, 8], strides = [1, 1]} : vector<8x32xbf16> to vector<8x8xbf16>
    %cst_19 = arith.constant dense<0.000000e+00> : vector<8x8xf32>
    %57 = tpu.matmul %55, %56, %cst_19 {dimension_numbers = #tpu.dot_dimension_numbers<[1], [0], [0], [1], [0, 0, 1, 1], [], []>} : vector<8x8xbf16>, vector<8x8xbf16>, vector<8x8xf32> -> vector<8x8xf32>
    %c0_20 = arith.constant 0 : index
    %c0_21 = arith.constant 0 : index
    %58 = vector.load %arg13[%c0_20, %c0_21] : memref<8x32xf32, #tpu.memory_space<vmem>>, vector<8x8xf32>
    tpu.vector_store %arg13[%c0_20, %c0_21], %57 {strides = array<i32>} : memref<8x32xf32, #tpu.memory_space<vmem>>, vector<8x8xf32>,
    %59 = vector.extract_strided_slice %39 {offsets = [0, 8], sizes = [8, 8], strides = [1, 1]} : vector<8x32xbf16> to vector<8x8xbf16>
    %60 = vector.extract_strided_slice %40 {offsets = [0, 8], sizes = [8, 8], strides = [1, 1]} : vector<8x32xbf16> to vector<8x8xbf16>
    %cst_22 = arith.constant dense<0.000000e+00> : vector<8x8xf32>
    %61 = tpu.matmul %59, %60, %cst_22 {dimension_numbers = #tpu.dot_dimension_numbers<[1], [1], [0], [0], [0, 0, 1, 0], [], []>} : vector<8x8xbf16>, vector<8x8xbf16>, vector<8x8xf32> -> vector<8x8xf32>
    %cst_23 = arith.constant dense<0xFF800000> : vector<8xf32>
    %62 = vector.multi_reduction <maximumf>, %61, %cst_23 [1] : vector<8x8xf32> to vector<8xf32>
    %63 = vector.shape_cast %62 : vector<8xf32> to vector<8x1xf32>
    %64 = vector.broadcast %63 : vector<8x1xf32> to vector<8x8xf32>
    %65 = arith.subf %61, %64 : vector<8x8xf32>
    %66 = math.exp %65 : vector<8x8xf32>
    %cst_24 = arith.constant dense<0.000000e+00> : vector<8xf32>
    %67 = vector.multi_reduction <add>, %66, %cst_24 [1] : vector<8x8xf32> to vector<8xf32>
    %68 = vector.shape_cast %67 : vector<8xf32> to vector<8x1xf32>
    %69 = tpu.reciprocal %68 {approx = true} : vector<8x1xf32> -> vector<8x1xf32>
    %70 = vector.broadcast %69 : vector<8x1xf32> to vector<8x8xf32>
    %71 = arith.mulf %66, %70 : vector<8x8xf32>
    %72 = arith.truncf %71 : vector<8x8xf32> to vector<8x8xbf16>
    %73 = vector.extract_strided_slice %41 {offsets = [0, 8], sizes = [8, 8], strides = [1, 1]} : vector<8x32xbf16> to vector<8x8xbf16>
    %cst_25 = arith.constant dense<0.000000e+00> : vector<8x8xf32>
    %74 = tpu.matmul %72, %73, %cst_25 {dimension_numbers = #tpu.dot_dimension_numbers<[1], [0], [0], [1], [0, 0, 1, 1], [], []>} : vector<8x8xbf16>, vector<8x8xbf16>, vector<8x8xf32> -> vector<8x8xf32>
    %c0_26 = arith.constant 0 : index
    %c8 = arith.constant 8 : index
    %75 = vector.load %arg13[%c0_26, %c8] : memref<8x32xf32, #tpu.memory_space<vmem>>, vector<8x8xf32>
    tpu.vector_store %arg13[%c0_26, %c8], %74 {strides = array<i32>} : memref<8x32xf32, #tpu.memory_space<vmem>>, vector<8x8xf32>,
    %76 = vector.extract_strided_slice %39 {offsets = [0, 16], sizes = [8, 8], strides = [1, 1]} : vector<8x32xbf16> to vector<8x8xbf16>
    %77 = vector.extract_strided_slice %40 {offsets = [0, 16], sizes = [8, 8], strides = [1, 1]} : vector<8x32xbf16> to vector<8x8xbf16>
    %cst_27 = arith.constant dense<0.000000e+00> : vector<8x8xf32>
    %78 = tpu.matmul %76, %77, %cst_27 {dimension_numbers = #tpu.dot_dimension_numbers<[1], [1], [0], [0], [0, 0, 1, 0], [], []>} : vector<8x8xbf16>, vector<8x8xbf16>, vector<8x8xf32> -> vector<8x8xf32>
    %cst_28 = arith.constant dense<0xFF800000> : vector<8xf32>
    %79 = vector.multi_reduction <maximumf>, %78, %cst_28 [1] : vector<8x8xf32> to vector<8xf32>
    %80 = vector.shape_cast %79 : vector<8xf32> to vector<8x1xf32>
    %81 = vector.broadcast %80 : vector<8x1xf32> to vector<8x8xf32>
    %82 = arith.subf %78, %81 : vector<8x8xf32>
    %83 = math.exp %82 : vector<8x8xf32>
    %cst_29 = arith.constant dense<0.000000e+00> : vector<8xf32>
    %84 = vector.multi_reduction <add>, %83, %cst_29 [1] : vector<8x8xf32> to vector<8xf32>
    %85 = vector.shape_cast %84 : vector<8xf32> to vector<8x1xf32>
    %86 = tpu.reciprocal %85 {approx = true} : vector<8x1xf32> -> vector<8x1xf32>
    %87 = vector.broadcast %86 : vector<8x1xf32> to vector<8x8xf32>
    %88 = arith.mulf %83, %87 : vector<8x8xf32>
    %89 = arith.truncf %88 : vector<8x8xf32> to vector<8x8xbf16>
    %90 = vector.extract_strided_slice %41 {offsets = [0, 16], sizes = [8, 8], strides = [1, 1]} : vector<8x32xbf16> to vector<8x8xbf16>
    %cst_30 = arith.constant dense<0.000000e+00> : vector<8x8xf32>
    %91 = tpu.matmul %89, %90, %cst_30 {dimension_numbers = #tpu.dot_dimension_numbers<[1], [0], [0], [1], [0, 0, 1, 1], [], []>} : vector<8x8xbf16>, vector<8x8xbf16>, vector<8x8xf32> -> vector<8x8xf32>
    %c0_31 = arith.constant 0 : index
    %c16 = arith.constant 16 : index
    %92 = vector.load %arg13[%c0_31, %c16] : memref<8x32xf32, #tpu.memory_space<vmem>>, vector<8x8xf32>
    tpu.vector_store %arg13[%c0_31, %c16], %91 {strides = array<i32>} : memref<8x32xf32, #tpu.memory_space<vmem>>, vector<8x8xf32>,
    %93 = vector.extract_strided_slice %39 {offsets = [0, 24], sizes = [8, 8], strides = [1, 1]} : vector<8x32xbf16> to vector<8x8xbf16>
    %94 = vector.extract_strided_slice %40 {offsets = [0, 24], sizes = [8, 8], strides = [1, 1]} : vector<8x32xbf16> to vector<8x8xbf16>
    %cst_32 = arith.constant dense<0.000000e+00> : vector<8x8xf32>
    %95 = tpu.matmul %93, %94, %cst_32 {dimension_numbers = #tpu.dot_dimension_numbers<[1], [1], [0], [0], [0, 0, 1, 0], [], []>} : vector<8x8xbf16>, vector<8x8xbf16>, vector<8x8xf32> -> vector<8x8xf32>
    %cst_33 = arith.constant dense<0xFF800000> : vector<8xf32>
    %96 = vector.multi_reduction <maximumf>, %95, %cst_33 [1] : vector<8x8xf32> to vector<8xf32>
    %97 = vector.shape_cast %96 : vector<8xf32> to vector<8x1xf32>
    %98 = vector.broadcast %97 : vector<8x1xf32> to vector<8x8xf32>
    %99 = arith.subf %95, %98 : vector<8x8xf32>
    %100 = math.exp %99 : vector<8x8xf32>
    %cst_34 = arith.constant dense<0.000000e+00> : vector<8xf32>
    %101 = vector.multi_reduction <add>, %100, %cst_34 [1] : vector<8x8xf32> to vector<8xf32>
    %102 = vector.shape_cast %101 : vector<8xf32> to vector<8x1xf32>
    %103 = tpu.reciprocal %102 {approx = true} : vector<8x1xf32> -> vector<8x1xf32>
    %104 = vector.broadcast %103 : vector<8x1xf32> to vector<8x8xf32>
    %105 = arith.mulf %100, %104 : vector<8x8xf32>
    %106 = arith.truncf %105 : vector<8x8xf32> to vector<8x8xbf16>
    %107 = vector.extract_strided_slice %41 {offsets = [0, 24], sizes = [8, 8], strides = [1, 1]} : vector<8x32xbf16> to vector<8x8xbf16>
    %cst_35 = arith.constant dense<0.000000e+00> : vector<8x8xf32>
    %108 = tpu.matmul %106, %107, %cst_35 {dimension_numbers = #tpu.dot_dimension_numbers<[1], [0], [0], [1], [0, 0, 1, 1], [], []>} : vector<8x8xbf16>, vector<8x8xbf16>, vector<8x8xf32> -> vector<8x8xf32>
    %c0_36 = arith.constant 0 : index
    %c24 = arith.constant 24 : index
    %109 = vector.load %arg13[%c0_36, %c24] : memref<8x32xf32, #tpu.memory_space<vmem>>, vector<8x8xf32>
    tpu.vector_store %arg13[%c0_36, %c24], %108 {strides = array<i32>} : memref<8x32xf32, #tpu.memory_space<vmem>>, vector<8x8xf32>,
    %c0_37 = arith.constant 0 : index
    %c0_38 = arith.constant 0 : index
    %110 = vector.load %arg13[%c0_37, %c0_38] : memref<8x32xf32, #tpu.memory_space<vmem>>, vector<8x32xf32>
    %c0_39 = arith.constant 0 : index
    %c0_40 = arith.constant 0 : index
    %111 = vector.load %arg6[%c0_39, %c0_40] : memref<32x32xbf16, #tpu.memory_space<vmem>>, vector<32x32xbf16>
    %112 = arith.truncf %110 : vector<8x32xf32> to vector<8x32xbf16>
    %cst_41 = arith.constant dense<0.000000e+00> : vector<8x32xf32>
    %113 = tpu.matmul %112, %111, %cst_41 {dimension_numbers = #tpu.dot_dimension_numbers<[1], [0], [0], [1], [0, 0, 1, 1], [], []>} : vector<8x32xbf16>, vector<32x32xbf16>, vector<8x32xf32> -> vector<8x32xf32>
    %c0_42 = arith.constant 0 : index
    %c0_43 = arith.constant 0 : index
    %114 = vector.load %arg7[%c0_42, %c0_43] : memref<1x32xf32, #tpu.memory_space<vmem>>, vector<1x32xf32>
    %115 = vector.broadcast %114 : vector<1x32xf32> to vector<8x32xf32>
    %116 = arith.addf %113, %115 : vector<8x32xf32>
    %cst_44 = arith.constant 0.000000e+00 : f32
    %117 = vector.broadcast %cst_44 : f32 to vector<8x32xf32>
    %118 = arith.maximumf %116, %117 : vector<8x32xf32>
    %c0_45 = arith.constant 0 : index
    %c0_46 = arith.constant 0 : index
    %119 = vector.load %arg8[%c0_45, %c0_46] : memref<32x96xbf16, #tpu.memory_space<vmem>>, vector<32x96xbf16>
    %c0_47 = arith.constant 0 : index
    %c0_48 = arith.constant 0 : index
    %120 = vector.load %arg9[%c0_47, %c0_48] : memref<32x64xbf16, #tpu.memory_space<vmem>>, vector<32x64xbf16>
    %c0_49 = arith.constant 0 : index
    %c0_50 = arith.constant 0 : index
    %121 = vector.load %arg10[%c0_49, %c0_50] : memref<32x32xbf16, #tpu.memory_space<vmem>>, vector<32x32xbf16>
    %c0_51 = arith.constant 0 : index
    %c0_52 = arith.constant 0 : index
    %122 = vector.load %arg11[%c0_51, %c0_52] : memref<1x32xf32, #tpu.memory_space<vmem>>, vector<1x32xf32>
    %123 = arith.truncf %118 : vector<8x32xf32> to vector<8x32xbf16>
    %cst_53 = arith.constant dense<0.000000e+00> : vector<8x96xf32>
    %124 = tpu.matmul %123, %119, %cst_53 {dimension_numbers = #tpu.dot_dimension_numbers<[1], [0], [0], [1], [0, 0, 1, 1], [], []>} : vector<8x32xbf16>, vector<32x96xbf16>, vector<8x96xf32> -> vector<8x96xf32>
    %125 = arith.truncf %1 : vector<8x32xf32> to vector<8x32xbf16>
    %cst_54 = arith.constant dense<0.000000e+00> : vector<8x64xf32>
    %126 = tpu.matmul %125, %120, %cst_54 {dimension_numbers = #tpu.dot_dimension_numbers<[1], [0], [0], [1], [0, 0, 1, 1], [], []>} : vector<8x32xbf16>, vector<32x64xbf16>, vector<8x64xf32> -> vector<8x64xf32>
    %127 = vector.extract_strided_slice %124 {offsets = [0, 0], sizes = [8, 32], strides = [1, 1]} : vector<8x96xf32> to vector<8x32xf32>
    %128 = vector.extract_strided_slice %126 {offsets = [0, 0], sizes = [8, 32], strides = [1, 1]} : vector<8x64xf32> to vector<8x32xf32>
    %129 = arith.addf %127, %128 : vector<8x32xf32>
    %130 = arith.negf %129 : vector<8x32xf32>
    %131 = math.exp %130 : vector<8x32xf32>
    %cst_55 = arith.constant 1.000000e+00 : f32
    %132 = vector.broadcast %cst_55 : f32 to vector<8x32xf32>
    %133 = arith.addf %132, %131 : vector<8x32xf32>
    %134 = arith.divf %132, %133 : vector<8x32xf32>
    %135 = vector.extract_strided_slice %124 {offsets = [0, 32], sizes = [8, 32], strides = [1, 1]} : vector<8x96xf32> to vector<8x32xf32>
    %136 = vector.extract_strided_slice %126 {offsets = [0, 32], sizes = [8, 32], strides = [1, 1]} : vector<8x64xf32> to vector<8x32xf32>
    %137 = arith.addf %135, %136 : vector<8x32xf32>
    %138 = vector.broadcast %122 : vector<1x32xf32> to vector<8x32xf32>
    %139 = arith.subf %137, %138 : vector<8x32xf32>
    %140 = arith.negf %139 : vector<8x32xf32>
    %141 = math.exp %140 : vector<8x32xf32>
    %cst_56 = arith.constant 1.000000e+00 : f32
    %142 = vector.broadcast %cst_56 : f32 to vector<8x32xf32>
    %143 = arith.addf %142, %141 : vector<8x32xf32>
    %144 = arith.divf %142, %143 : vector<8x32xf32>
    %145 = vector.extract_strided_slice %124 {offsets = [0, 64], sizes = [8, 32], strides = [1, 1]} : vector<8x96xf32> to vector<8x32xf32>
    %146 = arith.mulf %134, %1 : vector<8x32xf32>
    %147 = arith.truncf %146 : vector<8x32xf32> to vector<8x32xbf16>
    %cst_57 = arith.constant dense<0.000000e+00> : vector<8x32xf32>
    %148 = tpu.matmul %147, %121, %cst_57 {dimension_numbers = #tpu.dot_dimension_numbers<[1], [0], [0], [1], [0, 0, 1, 1], [], []>} : vector<8x32xbf16>, vector<32x32xbf16>, vector<8x32xf32> -> vector<8x32xf32>
    %149 = arith.addf %145, %148 : vector<8x32xf32>
    %150 = math.tanh %149 : vector<8x32xf32>
    %cst_58 = arith.constant 1.000000e+00 : f32
    %151 = vector.broadcast %cst_58 : f32 to vector<8x32xf32>
    %152 = arith.subf %151, %144 : vector<8x32xf32>
    %153 = arith.mulf %152, %1 : vector<8x32xf32>
    %154 = arith.mulf %144, %150 : vector<8x32xf32>
    %155 = arith.addf %153, %154 : vector<8x32xf32>
    %c0_59 = arith.constant 0 : index
    %c0_60 = arith.constant 0 : index
    %c0_61 = arith.constant 0 : index
    %156 = vector.load %arg12[%c0_59, %c0_60, %c0_61] : memref<1x8x32xf32, #tpu.memory_space<vmem>>, vector<1x8x32xf32>
    %157 = vector.shape_cast %156 : vector<1x8x32xf32> to vector<8x32xf32>
    %158 = vector.shape_cast %155 : vector<8x32xf32> to vector<1x8x32xf32>
    tpu.vector_store %arg12[%c0_59, %c0_60, %c0_61], %158 {strides = array<i32>} : memref<1x8x32xf32, #tpu.memory_space<vmem>>, vector<1x8x32xf32>,
    return
  }
  func.func @transform_0(%arg0: i32) -> (i32, i32, i32) {
    %c0_i32 = arith.constant 0 : i32
    %c0_i32_0 = arith.constant 0 : i32
    %c0_i32_1 = arith.constant 0 : i32
    return %arg0, %c0_i32, %c0_i32_0 : i32, i32, i32
  }
  func.func @transform_1(%arg0: i32) -> (i32, i32) {
    %c0_i32 = arith.constant 0 : i32
    %c0_i32_0 = arith.constant 0 : i32
    %c0_i32_1 = arith.constant 0 : i32
    return %c0_i32, %c0_i32_0 : i32, i32
  }
  func.func @transform_2(%arg0: i32) -> (i32, i32) {
    %c0_i32 = arith.constant 0 : i32
    %c0_i32_0 = arith.constant 0 : i32
    %c0_i32_1 = arith.constant 0 : i32
    return %c0_i32, %c0_i32_0 : i32, i32
  }
  func.func @transform_3(%arg0: i32) -> (i32, i32) {
    %c0_i32 = arith.constant 0 : i32
    %c0_i32_0 = arith.constant 0 : i32
    %c0_i32_1 = arith.constant 0 : i32
    return %c0_i32, %c0_i32_0 : i32, i32
  }
  func.func @transform_4(%arg0: i32) -> (i32, i32) {
    %c0_i32 = arith.constant 0 : i32
    %c0_i32_0 = arith.constant 0 : i32
    %c0_i32_1 = arith.constant 0 : i32
    return %c0_i32, %c0_i32_0 : i32, i32
  }
  func.func @transform_5(%arg0: i32) -> (i32, i32) {
    %c0_i32 = arith.constant 0 : i32
    %c0_i32_0 = arith.constant 0 : i32
    %c0_i32_1 = arith.constant 0 : i32
    return %c0_i32, %c0_i32_0 : i32, i32
  }
  func.func @transform_6(%arg0: i32) -> (i32, i32) {
    %c0_i32 = arith.constant 0 : i32
    %c0_i32_0 = arith.constant 0 : i32
    %c0_i32_1 = arith.constant 0 : i32
    return %c0_i32, %c0_i32_0 : i32, i32
  }
  func.func @transform_7(%arg0: i32) -> (i32, i32) {
    %c0_i32 = arith.constant 0 : i32
    %c0_i32_0 = arith.constant 0 : i32
    %c0_i32_1 = arith.constant 0 : i32
    return %c0_i32, %c0_i32_0 : i32, i32
  }
  func.func @transform_8(%arg0: i32) -> (i32, i32) {
    %c0_i32 = arith.constant 0 : i32
    %c0_i32_0 = arith.constant 0 : i32
    %c0_i32_1 = arith.constant 0 : i32
    return %c0_i32, %c0_i32_0 : i32, i32
  }
  func.func @transform_9(%arg0: i32) -> (i32, i32) {
    %c0_i32 = arith.constant 0 : i32
    %c0_i32_0 = arith.constant 0 : i32
    %c0_i32_1 = arith.constant 0 : i32
    return %c0_i32, %c0_i32_0 : i32, i32
  }
  func.func @transform_10(%arg0: i32) -> (i32, i32) {
    %c0_i32 = arith.constant 0 : i32
    %c0_i32_0 = arith.constant 0 : i32
    %c0_i32_1 = arith.constant 0 : i32
    return %c0_i32, %c0_i32_0 : i32, i32
  }
  func.func @transform_11(%arg0: i32) -> (i32, i32, i32) {
    %c0_i32 = arith.constant 0 : i32
    %c0_i32_0 = arith.constant 0 : i32
    %c0_i32_1 = arith.constant 0 : i32
    return %arg0, %c0_i32, %c0_i32_0 : i32, i32, i32
  }
}

</mosaic_0001>

<llo_original>
// kernel: tpu_custom_call.1
$region0: #{tpu_custom_call.1}
  #allocation0 [shape = 'u32[]', space=smem, size = 0x4, offset = 0x4, fixed_abs, tag = 'smem constant byte address 0x4 - core index']
  #allocation1 [shape = 'u32[144,128]{1,0:T(1,128)}', space=vmem, size = 0x12000, scoped, tag = 'internal scratch']
  #allocation2 [shape = 'f32[8,32]{1,0:T(8,128)}', space=vmem, size = 0x1000, scoped, tag = 'scratch operand']
  %s0 = inlined_call_operand.hbm [shape: f32[2,8,32], index: 0, kind: input, shape index: {}]
  %s1 = inlined_call_operand.hbm [shape: f32[1,32], index: 1, kind: input, shape index: {}]
  %s2 = inlined_call_operand.hbm [shape: f32[1,32], index: 2, kind: input, shape index: {}]
  %s3 = inlined_call_operand.hbm [shape: bf16[32,96], index: 3, kind: input, shape index: {}]
  %s4 = inlined_call_operand.hbm [shape: f32[1,96], index: 4, kind: input, shape index: {}]
  %s5 = inlined_call_operand.hbm [shape: bf16[32,32], index: 5, kind: input, shape index: {}]
  %s6 = inlined_call_operand.hbm [shape: f32[1,32], index: 6, kind: input, shape index: {}]
  %s7 = inlined_call_operand.hbm [shape: bf16[32,96], index: 7, kind: input, shape index: {}]
  %s8 = inlined_call_operand.hbm [shape: bf16[32,64], index: 8, kind: input, shape index: {}]
  %s9 = inlined_call_operand.vmem [shape: bf16[32,32], index: 9, kind: input, shape index: {}]
  %s10 = inlined_call_operand.vmem [shape: f32[1,32], index: 10, kind: input, shape index: {}]
  %s11 = inlined_call_operand.hbm [shape: f32[2,8,32], index: 11, kind: output, shape index: {}]
  %s12 = sld [smem:[#allocation0]]
  $region113: #{tpu_custom_call.1} parent=0
    _
  %s14 = ssub.s32 1, %s12
  %s15 = scalar_select 0, %s14, %s12
  $region1: #{tpu_custom_call.1} parent=0
    #allocation3 [shape = 'u8[8192]{0}', space=vmem, size = 0x2000, scoped, tag = 'input window, operand 0']
    #allocation4 [shape = 's32[2]{0}', space=sflag, size = 0x8, scoped, tag = 'scoped memory for tpu_custom_call.1']
    #allocation5 [shape = 's32[2]{0}', space=sflag, size = 0x8, scoped, tag = 'scoped memory for tpu_custom_call.1']
    #allocation6 [shape = 'u8[512]{0}', space=vmem, size = 0x400, scoped, tag = 'input window, operand 1, single buffered']
    #allocation7 [shape = 's32[1]{0}', space=sflag, size = 0x4, scoped, tag = 'scoped memory for tpu_custom_call.1']
    #allocation8 [shape = 'u8[512]{0}', space=vmem, size = 0x400, scoped, tag = 'input window, operand 2, single buffered']
    #allocation9 [shape = 'u8[8192]{0}', space=vmem, size = 0x2000, scoped, tag = 'input window, operand 3, single buffered']
    #allocation10 [shape = 's32[1]{0}', space=sflag, size = 0x4, scoped, tag = 'scoped memory for tpu_custom_call.1']
    #allocation11 [shape = 'u8[512]{0}', space=vmem, size = 0x400, scoped, tag = 'input window, operand 4, single buffered']
    #allocation12 [shape = 'u8[8192]{0}', space=vmem, size = 0x2000, scoped, tag = 'input window, operand 5, single buffered']
    #allocation13 [shape = 's32[1]{0}', space=sflag, size = 0x4, scoped, tag = 'scoped memory for tpu_custom_call.1']
    #allocation14 [shape = 'u8[512]{0}', space=vmem, size = 0x400, scoped, tag = 'input window, operand 6, single buffered']
    #allocation15 [shape = 'u8[8192]{0}', space=vmem, size = 0x2000, scoped, tag = 'input window, operand 7, single buffered']
    #allocation16 [shape = 's32[1]{0}', space=sflag, size = 0x4, scoped, tag = 'scoped memory for tpu_custom_call.1']
    #allocation17 [shape = 'u8[8192]{0}', space=vmem, size = 0x2000, scoped, tag = 'input window, operand 8, single buffered']
    #allocation18 [shape = 'u8[8192]{0}', space=vmem, size = 0x2000, scoped, tag = 'output window, operand 0']
    %16 = vsyncpa [#allocation4], 0
    %s17 = scalar_lea.sflag [#allocation4], 1
    %18 = vsyncpa %s17, 0
    %19 = vsyncpa [#allocation7], 0
    %20 = vsyncpa [#allocation10], 0
    %21 = vsyncpa [#allocation13], 0
    %22 = vsyncpa [#allocation16], 0
    %23 = vsyncpa [#allocation5], 0
    %s24 = scalar_lea.sflag [#allocation5], 1
    %25 = vsyncpa %s24, 0
    loop: start=0, step=1, limit=4
    $region2: #{tpu_custom_call.1} parent=1 // loop_pre_header
      _
    $region3: #{tpu_custom_call.1} parent=1 // loop_header
      %s27 = sphi 0, %s31
      %p28 = scmp.ge.s32.totalorder %s27, 4
      %s37 = sphi 0, %s39
      %s40 = sphi 0, %s37
      %s41 = sphi 0, %s40
      %s57 = sphi 0, %s41
      %s61 = sphi 0, %s61
      %s63 = sphi 0, %s61
      %s64 = sphi 0, %s63
      %s78 = sphi 0, %s64
      %s82 = sphi 0, %s82
      %s84 = sphi 0, %s82
      %s85 = sphi 0, %s84
      %s99 = sphi 0, %s85
      %s103 = sphi 0, %s103
      %s105 = sphi 0, %s103
      %s106 = sphi 0, %s105
      %s120 = sphi 0, %s106
      %s124 = sphi 0, %s124
      %s126 = sphi 0, %s124
      %s127 = sphi 0, %s126
      %s141 = sphi 0, %s127
      %s145 = sphi 0, %s145
      %s147 = sphi 0, %s145
      %s148 = sphi 0, %s147
      %s162 = sphi 0, %s148
      %s166 = sphi 0, %s166
      %s168 = sphi 0, %s166
      %s169 = sphi 0, %s168
      %s183 = sphi 0, %s169
      %s187 = sphi 0, %s187
      %s189 = sphi 0, %s187
      %s190 = sphi 0, %s189
      %s204 = sphi 0, %s190
      %s208 = sphi 0, %s208
      %s210 = sphi 0, %s208
      %s211 = sphi 0, %s210
      %s225 = sphi 0, %s211
      %s229 = sphi 0, %s229
      %s231 = sphi 0, %s229
      %s232 = sphi 0, %s231
      %s246 = sphi 0, %s232
      %s250 = sphi 0, %s250
      %s252 = sphi 0, %s250
      %s253 = sphi 0, %s252
      %s267 = sphi 0, %s253
      %s273 = sphi 0, %s275
      %s276 = sphi 0, %s273
      %s277 = sphi 0, %s276
      %s293 = sphi 0, %s277
    $region4: #{tpu_custom_call.1} parent=1 // loop_header_branch
      %30 = sbr.rel (%p28) target = $region8
    $region5: #{tpu_custom_call.1} parent=1 // loop_body
      %s32 = ssub.s32 %s27, 1
      %s33 = ssub.s32 %s27, 2
      %s34 = sadd.s32 %s27, 1
      %s35 = ssub.s32 %s27, %s34
      %p36 = scmp.eq.s32.totalorder %s35, 0
      %s38 = sadd.s32 %s37, 1
      %s39 = scalar_select %p36, %s37, %s38
      %p42 = pneg %p36
      %p43 = scmp.eq.s32.totalorder %s27, 1
      %p44 = por %p42, %p43
      %p45 = scmp.ne.s32.totalorder %s37, %s40
      %p46 = scmp.eq.s32.totalorder %s27, 0
      %p47 = por %p45, %p46
      %p48 = scmp.ne.s32.totalorder %s37, %s40
      %p49 = scmp.eq.s32.totalorder %s32, 1
      %p50 = por %p48, %p49
      %p51 = scmp.ne.s32.totalorder %s40, %s41
      %p52 = scmp.eq.s32.totalorder %s32, 0
      %p53 = por %p51, %p52
      %p54 = scmp.ne.s32.totalorder %s40, %s41
      %p55 = scmp.eq.s32.totalorder %s33, 1
      %p56 = por %p54, %p55
      %p58 = scmp.ne.s32.totalorder %s41, %s57
      %p59 = scmp.eq.s32.totalorder %s33, 0
      %p60 = por %p58, %p59
      %s62 = sadd.s32 %s61, 1
      %p65 = scmp.eq.s32.totalorder %s27, 1
      %p66 = scmp.ne.s32.totalorder %s61, %s63
      %p67 = scmp.eq.s32.totalorder %s27, 0
      %p68 = por %p66, %p67
      %p69 = scmp.ne.s32.totalorder %s61, %s63
      %p70 = scmp.eq.s32.totalorder %s32, 1
      %p71 = por %p69, %p70
      %p72 = scmp.ne.s32.totalorder %s63, %s64
      %p73 = scmp.eq.s32.totalorder %s32, 0
      %p74 = por %p72, %p73
      %p75 = scmp.ne.s32.totalorder %s63, %s64
      %p76 = scmp.eq.s32.totalorder %s33, 1
      %p77 = por %p75, %p76
      %p79 = scmp.ne.s32.totalorder %s64, %s78
      %p80 = scmp.eq.s32.totalorder %s33, 0
      %p81 = por %p79, %p80
      %s83 = sadd.s32 %s82, 1
      %p86 = scmp.eq.s32.totalorder %s27, 1
      %p87 = scmp.ne.s32.totalorder %s82, %s84
      %p88 = scmp.eq.s32.totalorder %s27, 0
      %p89 = por %p87, %p88
      %p90 = scmp.ne.s32.totalorder %s82, %s84
      %p91 = scmp.eq.s32.totalorder %s32, 1
      %p92 = por %p90, %p91
      %p93 = scmp.ne.s32.totalorder %s84, %s85
      %p94 = scmp.eq.s32.totalorder %s32, 0
      %p95 = por %p93, %p94
      %p96 = scmp.ne.s32.totalorder %s84, %s85
      %p97 = scmp.eq.s32.totalorder %s33, 1
      %p98 = por %p96, %p97
      %p100 = scmp.ne.s32.totalorder %s85, %s99
      %p101 = scmp.eq.s32.totalorder %s33, 0
      %p102 = por %p100, %p101
      %s104 = sadd.s32 %s103, 1
      %p107 = scmp.eq.s32.totalorder %s27, 1
      %p108 = scmp.ne.s32.totalorder %s103, %s105
      %p109 = scmp.eq.s32.totalorder %s27, 0
      %p110 = por %p108, %p109
      %p111 = scmp.ne.s32.totalorder %s103, %s105
      %p112 = scmp.eq.s32.totalorder %s32, 1
      %p113 = por %p111, %p112
      %p114 = scmp.ne.s32.totalorder %s105, %s106
      %p115 = scmp.eq.s32.totalorder %s32, 0
      %p116 = por %p114, %p115
      %p117 = scmp.ne.s32.totalorder %s105, %s106
      %p118 = scmp.eq.s32.totalorder %s33, 1
      %p119 = por %p117, %p118
      %p121 = scmp.ne.s32.totalorder %s106, %s120
      %p122 = scmp.eq.s32.totalorder %s33, 0
      %p123 = por %p121, %p122
      %s125 = sadd.s32 %s124, 1
      %p128 = scmp.eq.s32.totalorder %s27, 1
      %p129 = scmp.ne.s32.totalorder %s124, %s126
      %p130 = scmp.eq.s32.totalorder %s27, 0
      %p131 = por %p129, %p130
      %p132 = scmp.ne.s32.totalorder %s124, %s126
      %p133 = scmp.eq.s32.totalorder %s32, 1
      %p134 = por %p132, %p133
      %p135 = scmp.ne.s32.totalorder %s126, %s127
      %p136 = scmp.eq.s32.totalorder %s32, 0
      %p137 = por %p135, %p136
      %p138 = scmp.ne.s32.totalorder %s126, %s127
      %p139 = scmp.eq.s32.totalorder %s33, 1
      %p140 = por %p138, %p139
      %p142 = scmp.ne.s32.totalorder %s127, %s141
      %p143 = scmp.eq.s32.totalorder %s33, 0
      %p144 = por %p142, %p143
      %s146 = sadd.s32 %s145, 1
      %p149 = scmp.eq.s32.totalorder %s27, 1
      %p150 = scmp.ne.s32.totalorder %s145, %s147
      %p151 = scmp.eq.s32.totalorder %s27, 0
      %p152 = por %p150, %p151
      %p153 = scmp.ne.s32.totalorder %s145, %s147
      %p154 = scmp.eq.s32.totalorder %s32, 1
      %p155 = por %p153, %p154
      %p156 = scmp.ne.s32.totalorder %s147, %s148
      %p157 = scmp.eq.s32.totalorder %s32, 0
      %p158 = por %p156, %p157
      %p159 = scmp.ne.s32.totalorder %s147, %s148
      %p160 = scmp.eq.s32.totalorder %s33, 1
      %p161 = por %p159, %p160
      %p163 = scmp.ne.s32.totalorder %s148, %s162
      %p164 = scmp.eq.s32.totalorder %s33, 0
      %p165 = por %p163, %p164
      %s167 = sadd.s32 %s166, 1
      %p170 = scmp.eq.s32.totalorder %s27, 1
      %p171 = scmp.ne.s32.totalorder %s166, %s168
      %p172 = scmp.eq.s32.totalorder %s27, 0
      %p173 = por %p171, %p172
      %p174 = scmp.ne.s32.totalorder %s166, %s168
      %p175 = scmp.eq.s32.totalorder %s32, 1
      %p176 = por %p174, %p175
      %p177 = scmp.ne.s32.totalorder %s168, %s169
      %p178 = scmp.eq.s32.totalorder %s32, 0
      %p179 = por %p177, %p178
      %p180 = scmp.ne.s32.totalorder %s168, %s169
      %p181 = scmp.eq.s32.totalorder %s33, 1
      %p182 = por %p180, %p181
      %p184 = scmp.ne.s32.totalorder %s169, %s183
      %p185 = scmp.eq.s32.totalorder %s33, 0
      %p186 = por %p184, %p185
      %s188 = sadd.s32 %s187, 1
      %p191 = scmp.eq.s32.totalorder %s27, 1
      %p192 = scmp.ne.s32.totalorder %s187, %s189
      %p193 = scmp.eq.s32.totalorder %s27, 0
      %p194 = por %p192, %p193
      %p195 = scmp.ne.s32.totalorder %s187, %s189
      %p196 = scmp.eq.s32.totalorder %s32, 1
      %p197 = por %p195, %p196
      %p198 = scmp.ne.s32.totalorder %s189, %s190
      %p199 = scmp.eq.s32.totalorder %s32, 0
      %p200 = por %p198, %p199
      %p201 = scmp.ne.s32.totalorder %s189, %s190
      %p202 = scmp.eq.s32.totalorder %s33, 1
      %p203 = por %p201, %p202
      %p205 = scmp.ne.s32.totalorder %s190, %s204
      %p206 = scmp.eq.s32.totalorder %s33, 0
      %p207 = por %p205, %p206
      %s209 = sadd.s32 %s208, 1
      %p212 = scmp.eq.s32.totalorder %s27, 1
      %p213 = scmp.ne.s32.totalorder %s208, %s210
      %p214 = scmp.eq.s32.totalorder %s27, 0
      %p215 = por %p213, %p214
      %p216 = scmp.ne.s32.totalorder %s208, %s210
      %p217 = scmp.eq.s32.totalorder %s32, 1
      %p218 = por %p216, %p217
      %p219 = scmp.ne.s32.totalorder %s210, %s211
      %p220 = scmp.eq.s32.totalorder %s32, 0
      %p221 = por %p219, %p220
      %p222 = scmp.ne.s32.totalorder %s210, %s211
      %p223 = scmp.eq.s32.totalorder %s33, 1
      %p224 = por %p222, %p223
      %p226 = scmp.ne.s32.totalorder %s211, %s225
      %p227 = scmp.eq.s32.totalorder %s33, 0
      %p228 = por %p226, %p227
      %s230 = sadd.s32 %s229, 1
      %p233 = scmp.eq.s32.totalorder %s27, 1
      %p234 = scmp.ne.s32.totalorder %s229, %s231
      %p235 = scmp.eq.s32.totalorder %s27, 0
      %p236 = por %p234, %p235
      %p237 = scmp.ne.s32.totalorder %s229, %s231
      %p238 = scmp.eq.s32.totalorder %s32, 1
      %p239 = por %p237, %p238
      %p240 = scmp.ne.s32.totalorder %s231, %s232
      %p241 = scmp.eq.s32.totalorder %s32, 0
      %p242 = por %p240, %p241
      %p243 = scmp.ne.s32.totalorder %s231, %s232
      %p244 = scmp.eq.s32.totalorder %s33, 1
      %p245 = por %p243, %p244
      %p247 = scmp.ne.s32.totalorder %s232, %s246
      %p248 = scmp.eq.s32.totalorder %s33, 0
      %p249 = por %p247, %p248
      %s251 = sadd.s32 %s250, 1
      %p254 = scmp.eq.s32.totalorder %s27, 1
      %p255 = scmp.ne.s32.totalorder %s250, %s252
      %p256 = scmp.eq.s32.totalorder %s27, 0
      %p257 = por %p255, %p256
      %p258 = scmp.ne.s32.totalorder %s250, %s252
      %p259 = scmp.eq.s32.totalorder %s32, 1
      %p260 = por %p258, %p259
      %p261 = scmp.ne.s32.totalorder %s252, %s253
      %p262 = scmp.eq.s32.totalorder %s32, 0
      %p263 = por %p261, %p262
      %p264 = scmp.ne.s32.totalorder %s252, %s253
      %p265 = scmp.eq.s32.totalorder %s33, 1
      %p266 = por %p264, %p265
      %p268 = scmp.ne.s32.totalorder %s253, %s267
      %p269 = scmp.eq.s32.totalorder %s33, 0
      %p270 = por %p268, %p269
      %s271 = ssub.s32 %s27, %s34
      %p272 = scmp.eq.s32.totalorder %s271, 0
      %s274 = sadd.s32 %s273, 1
      %s275 = scalar_select %p272, %s273, %s274
      %p278 = pneg %p272
      %p279 = scmp.eq.s32.totalorder %s27, 1
      %p280 = por %p278, %p279
      %p281 = scmp.ne.s32.totalorder %s273, %s276
      %p282 = scmp.eq.s32.totalorder %s27, 0
      %p283 = por %p281, %p282
      %p284 = scmp.ne.s32.totalorder %s273, %s276
      %p285 = scmp.eq.s32.totalorder %s32, 1
      %p286 = por %p284, %p285
      %p287 = scmp.ne.s32.totalorder %s276, %s277
      %p288 = scmp.eq.s32.totalorder %s32, 0
      %p289 = por %p287, %p288
      %p290 = scmp.ne.s32.totalorder %s276, %s277
      %p291 = scmp.eq.s32.totalorder %s33, 1
      %p292 = por %p290, %p291
      %p294 = scmp.ne.s32.totalorder %s277, %s293
      %p295 = scmp.eq.s32.totalorder %s33, 0
      %p296 = por %p294, %p295
      %p297 = scmp.le.s32.totalorder 1, %s27
      %p298 = scmp.lt.s32.totalorder %s27, 3
      %p299 = pnand %p297, %p298
      %p300 = pneg %p299
      // Predicated region
      $region9: #{tpu_custom_call.1} parent=5 // pred_check
        _
      $region10: #{tpu_custom_call.1} parent=5 // pred_check_branch
        %302 = sbr.rel (%p299) target = $region12
      $region11: #{tpu_custom_call.1} parent=5 // pred_region
        %s303 = ssub.s32 %s27, 1
        // Predicated region
        $region13: #{tpu_custom_call.1} parent=11 // pred_check
          %p304 = pneg %p74
        $region14: #{tpu_custom_call.1} parent=11 // pred_check_branch
          %306 = sbr.rel (%p304) target = $region16
        $region15: #{tpu_custom_call.1} parent=11 // pred_region
          %s308 = ssub.s32 16, 16
          %309 = vsyncadd [#allocation7], %s308
          %s311 = sshll.u32 [#allocation6], 4
          %s312 = int_to_ptr.vmem [resolvable:$true] %s311
          %314 = dma.hbm_to_vmem [thread:$0]  %s1, 16, %s312, [#allocation7]
        $region16: #{tpu_custom_call.1} parent=11 // pred_fallthru
          _
        // Predicated region
        $region17: #{tpu_custom_call.1} parent=11 // pred_check
          %p315 = pneg %p95
        $region18: #{tpu_custom_call.1} parent=11 // pred_check_branch
          %317 = sbr.rel (%p315) target = $region20
        $region19: #{tpu_custom_call.1} parent=11 // pred_region
          %s319 = ssub.s32 16, 16
          %320 = vsyncadd [#allocation7], %s319
          %s322 = sshll.u32 [#allocation8], 4
          %s323 = int_to_ptr.vmem [resolvable:$true] %s322
          %325 = dma.hbm_to_vmem [thread:$0]  %s2, 16, %s323, [#allocation7]
        $region20: #{tpu_custom_call.1} parent=11 // pred_fallthru
          _
        // Predicated region
        $region21: #{tpu_custom_call.1} parent=11 // pred_check
          %p326 = pneg %p116
        $region22: #{tpu_custom_call.1} parent=11 // pred_check_branch
          %328 = sbr.rel (%p326) target = $region24
        $region23: #{tpu_custom_call.1} parent=11 // pred_region
          %s330 = ssub.s32 256, 256
          %331 = vsyncadd [#allocation10], %s330
          %s332 = sshll.u32 [#allocation9], 4
          %s333 = int_to_ptr.vmem [resolvable:$true] %s332
          %338 = dma.hbm_to_vmem [thread:$0]  %s3, 256, %s333, [#allocation10], 64, 64, 4
        $region24: #{tpu_custom_call.1} parent=11 // pred_fallthru
          _
        // Predicated region
        $region25: #{tpu_custom_call.1} parent=11 // pred_check
          %p339 = pneg %p137
        $region26: #{tpu_custom_call.1} parent=11 // pred_check_branch
          %341 = sbr.rel (%p339) target = $region28
        $region27: #{tpu_custom_call.1} parent=11 // pred_region
          %s343 = ssub.s32 16, 16
          %344 = vsyncadd [#allocation10], %s343
          %s346 = sshll.u32 [#allocation11], 4
          %s347 = int_to_ptr.vmem [resolvable:$true] %s346
          %349 = dma.hbm_to_vmem [thread:$0]  %s4, 16, %s347, [#allocation10]
        $region28: #{tpu_custom_call.1} parent=11 // pred_fallthru
          _
        // Predicated region
        $region29: #{tpu_custom_call.1} parent=11 // pred_check
          %p350 = pneg %p158
        $region30: #{tpu_custom_call.1} parent=11 // pred_check_branch
          %352 = sbr.rel (%p350) target = $region32
        $region31: #{tpu_custom_call.1} parent=11 // pred_region
          %s354 = ssub.s32 256, 256
          %355 = vsyncadd [#allocation13], %s354
          %s356 = sshll.u32 [#allocation12], 4
          %s357 = int_to_ptr.vmem [resolvable:$true] %s356
          %362 = dma.hbm_to_vmem [thread:$0]  %s5, 256, %s357, [#allocation13], 64, 64, 4
        $region32: #{tpu_custom_call.1} parent=11 // pred_fallthru
          _
        // Predicated region
        $region33: #{tpu_custom_call.1} parent=11 // pred_check
          %p363 = pneg %p179
        $region34: #{tpu_custom_call.1} parent=11 // pred_check_branch
          %365 = sbr.rel (%p363) target = $region36
        $region35: #{tpu_custom_call.1} parent=11 // pred_region
          %s367 = ssub.s32 16, 16
          %368 = vsyncadd [#allocation13], %s367
          %s370 = sshll.u32 [#allocation14], 4
          %s371 = int_to_ptr.vmem [resolvable:$true] %s370
          %373 = dma.hbm_to_vmem [thread:$0]  %s6, 16, %s371, [#allocation13]
        $region36: #{tpu_custom_call.1} parent=11 // pred_fallthru
          _
        // Predicated region
        $region37: #{tpu_custom_call.1} parent=11 // pred_check
          %p374 = pneg %p200
        $region38: #{tpu_custom_call.1} parent=11 // pred_check_branch
          %376 = sbr.rel (%p374) target = $region40
        $region39: #{tpu_custom_call.1} parent=11 // pred_region
          %s378 = ssub.s32 256, 256
          %379 = vsyncadd [#allocation16], %s378
          %s380 = sshll.u32 [#allocation15], 4
          %s381 = int_to_ptr.vmem [resolvable:$true] %s380
          %386 = dma.hbm_to_vmem [thread:$0]  %s7, 256, %s381, [#allocation16], 64, 64, 4
        $region40: #{tpu_custom_call.1} parent=11 // pred_fallthru
          _
        // Predicated region
        $region41: #{tpu_custom_call.1} parent=11 // pred_check
          %p387 = pneg %p221
        $region42: #{tpu_custom_call.1} parent=11 // pred_check_branch
          %389 = sbr.rel (%p387) target = $region44
        $region43: #{tpu_custom_call.1} parent=11 // pred_region
          %s391 = ssub.s32 256, 256
          %392 = vsyncadd [#allocation16], %s391
          %s393 = sshll.u32 [#allocation17], 4
          %s394 = int_to_ptr.vmem [resolvable:$true] %s393
          %399 = dma.hbm_to_vmem [thread:$0]  %s8, 256, %s394, [#allocation16], 64, 64, 4
        $region44: #{tpu_custom_call.1} parent=11 // pred_fallthru
          _
        // Predicated region
        $region45: #{tpu_custom_call.1} parent=11 // pred_check
          %p400 = pneg %p242
        $region46: #{tpu_custom_call.1} parent=11 // pred_check_branch
          %402 = sbr.rel (%p400) target = $region48
        $region47: #{tpu_custom_call.1} parent=11 // pred_region
          _
        $region48: #{tpu_custom_call.1} parent=11 // pred_fallthru
          _
        // Predicated region
        $region49: #{tpu_custom_call.1} parent=11 // pred_check
          %p403 = pneg %p263
        $region50: #{tpu_custom_call.1} parent=11 // pred_check_branch
          %405 = sbr.rel (%p403) target = $region52
        $region51: #{tpu_custom_call.1} parent=11 // pred_region
          _
        $region52: #{tpu_custom_call.1} parent=11 // pred_fallthru
          _
      $region12: #{tpu_custom_call.1} parent=5 // pred_fallthru
        _
      %p406 = scmp.lt.s32.totalorder %s27, 2
      // Predicated region
      $region53: #{tpu_custom_call.1} parent=5 // pred_check
        %p407 = pneg %p406
      $region54: #{tpu_custom_call.1} parent=5 // pred_check_branch
        %409 = sbr.rel (%p407) target = $region56
      $region55: #{tpu_custom_call.1} parent=5 // pred_region
        // Predicated region
        $region57: #{tpu_custom_call.1} parent=55 // pred_check
          %p410 = pneg %p47
        $region58: #{tpu_custom_call.1} parent=55 // pred_check_branch
          %412 = sbr.rel (%p410) target = $region60
        $region59: #{tpu_custom_call.1} parent=55 // pred_region
          %s413 = sand.u32 %s37, 1
          %s414 = scalar_lea.sflag [#allocation4], %s413
          %s415 = sand.u32 %s37, 1
          %s416 = smul.addr %s415, 8
          %s417 = scalar_lea.vmem [#allocation3], %s416
          %s419 = ssub.s32 128, 128
          %420 = vsyncadd %s414, %s419
          %s421 = smul.addr %s27, 128
          %s422 = scalar_lea.hbm %s0, %s421
          %s424 = sshll.u32 %s417, 4
          %s425 = int_to_ptr.vmem [resolvable:$true] %s424
          %427 = dma.hbm_to_vmem [thread:$0]  %s422, 128, %s425, %s414
        $region60: #{tpu_custom_call.1} parent=55 // pred_fallthru
          _
      $region56: #{tpu_custom_call.1} parent=5 // pred_fallthru
        _
      %p428 = scmp.le.s32.totalorder 1, %s27
      %p429 = scmp.lt.s32.totalorder %s27, 3
      %p430 = pnand %p428, %p429
      %p431 = pneg %p430
      // Predicated region
      $region61: #{tpu_custom_call.1} parent=5 // pred_check
        _
      $region62: #{tpu_custom_call.1} parent=5 // pred_check_branch
        %433 = sbr.rel (%p430) target = $region64
      $region63: #{tpu_custom_call.1} parent=5 // pred_region
        %s434 = ssub.s32 %s27, 1
        %s435 = sand.u32 %s40, 1
        %s436 = scalar_lea.sflag [#allocation4], %s435
        %s437 = sand.u32 %s40, 1
        %s438 = smul.addr %s437, 8
        %s439 = scalar_lea.vmem [#allocation3], %s438
        // Predicated region
        $region65: #{tpu_custom_call.1} parent=63 // pred_check
          %p440 = pneg %p53
        $region66: #{tpu_custom_call.1} parent=63 // pred_check_branch
          %442 = sbr.rel (%p440) target = $region68
        $region67: #{tpu_custom_call.1} parent=63 // pred_region
          %443 = dma.done %s436, 128
        $region68: #{tpu_custom_call.1} parent=63 // pred_fallthru
          _
        // Predicated region
        $region69: #{tpu_custom_call.1} parent=63 // pred_check
          %p444 = pneg %p74
        $region70: #{tpu_custom_call.1} parent=63 // pred_check_branch
          %446 = sbr.rel (%p444) target = $region72
        $region71: #{tpu_custom_call.1} parent=63 // pred_region
          %447 = dma.done [#allocation7], 16
        $region72: #{tpu_custom_call.1} parent=63 // pred_fallthru
          _
        // Predicated region
        $region73: #{tpu_custom_call.1} parent=63 // pred_check
          %p448 = pneg %p95
        $region74: #{tpu_custom_call.1} parent=63 // pred_check_branch
          %450 = sbr.rel (%p448) target = $region76
        $region75: #{tpu_custom_call.1} parent=63 // pred_region
          %451 = dma.done [#allocation7], 16
        $region76: #{tpu_custom_call.1} parent=63 // pred_fallthru
          _
        // Predicated region
        $region77: #{tpu_custom_call.1} parent=63 // pred_check
          %p452 = pneg %p116
        $region78: #{tpu_custom_call.1} parent=63 // pred_check_branch
          %454 = sbr.rel (%p452) target = $region80
        $region79: #{tpu_custom_call.1} parent=63 // pred_region
          %455 = dma.done [#allocation10], 256
        $region80: #{tpu_custom_call.1} parent=63 // pred_fallthru
          _
        // Predicated region
        $region81: #{tpu_custom_call.1} parent=63 // pred_check
          %p456 = pneg %p137
        $region82: #{tpu_custom_call.1} parent=63 // pred_check_branch
          %458 = sbr.rel (%p456) target = $region84
        $region83: #{tpu_custom_call.1} parent=63 // pred_region
          %459 = dma.done [#allocation10], 16
        $region84: #{tpu_custom_call.1} parent=63 // pred_fallthru
          _
        // Predicated region
        $region85: #{tpu_custom_call.1} parent=63 // pred_check
          %p460 = pneg %p158
        $region86: #{tpu_custom_call.1} parent=63 // pred_check_branch
          %462 = sbr.rel (%p460) target = $region88
        $region87: #{tpu_custom_call.1} parent=63 // pred_region
          %463 = dma.done [#allocation13], 256
        $region88: #{tpu_custom_call.1} parent=63 // pred_fallthru
          _
        // Predicated region
        $region89: #{tpu_custom_call.1} parent=63 // pred_check
          %p464 = pneg %p179
        $region90: #{tpu_custom_call.1} parent=63 // pred_check_branch
          %466 = sbr.rel (%p464) target = $region92
        $region91: #{tpu_custom_call.1} parent=63 // pred_region
          %467 = dma.done [#allocation13], 16
        $region92: #{tpu_custom_call.1} parent=63 // pred_fallthru
          _
        // Predicated region
        $region93: #{tpu_custom_call.1} parent=63 // pred_check
          %p468 = pneg %p200
        $region94: #{tpu_custom_call.1} parent=63 // pred_check_branch
          %470 = sbr.rel (%p468) target = $region96
        $region95: #{tpu_custom_call.1} parent=63 // pred_region
          %471 = dma.done [#allocation16], 256
        $region96: #{tpu_custom_call.1} parent=63 // pred_fallthru
          _
        // Predicated region
        $region97: #{tpu_custom_call.1} parent=63 // pred_check
          %p472 = pneg %p221
        $region98: #{tpu_custom_call.1} parent=63 // pred_check_branch
          %474 = sbr.rel (%p472) target = $region100
        $region99: #{tpu_custom_call.1} parent=63 // pred_region
          %475 = dma.done [#allocation16], 256
        $region100: #{tpu_custom_call.1} parent=63 // pred_fallthru
          _
        %s476 = sand.u32 %s40, 1
        %s477 = scalar_lea.sflag [#allocation4], %s476
        %s478 = sand.u32 %s40, 1
        %s479 = smul.addr %s478, 8
        %s480 = scalar_lea.vmem [#allocation3], %s479
        %p481 = pneg %p53
        %p482 = pneg %p50
        %p483 = pneg %p74
        %p484 = pneg %p71
        %p485 = pneg %p95
        %p486 = pneg %p92
        %p487 = pneg %p116
        %p488 = pneg %p113
        %p489 = pneg %p137
        %p490 = pneg %p134
        %p491 = pneg %p158
        %p492 = pneg %p155
        %p493 = pneg %p179
        %p494 = pneg %p176
        %p495 = pneg %p200
        %p496 = pneg %p197
        %p497 = pneg %p221
        %p498 = pneg %p218
        %p499 = pneg %p242
        %p500 = pneg %p239
        %p501 = pneg %p263
        %p502 = pneg %p260
        %p503 = pneg %p289
        %p504 = pneg %p286
        %s505 = sand.u32 %s276, 1
        %s506 = scalar_lea.sflag [#allocation5], %s505
        %s507 = sand.u32 %s276, 1
        %s508 = smul.addr %s507, 8
        %s509 = scalar_lea.vmem [#allocation18], %s508
        %v511 = vld [vmem:[%s439] sm:$0xff]
        %v512 = vld [vmem:[#allocation6] sm:$0x1]
        %v513 = vld [vmem:[#allocation8] sm:$0x1]
        %vm514 = vcmask 261120
        %v515 = vsel %vm514, %v511, 0.0
        %516 = vadd.xlane.f32.xlu0 %v515
        %v517 = vpop.xlane.xlu0 %516
        %v518 = vrcp.pop 32.0
        %v519 = vmul.f32 %v517, %v518
        %v520 = vsub.f32 %v511, %v519
        %v521 = vmul.f32 %v520, %v520
        %v522 = vsel %vm514, %v521, 0.0
        %523 = vadd.xlane.f32.xlu0 %v522
        %v524 = vpop.xlane.xlu0 %523
        %v525 = vmul.f32 %v524, %v518
        %v526 = vadd.f32 %v525, 1e-05
        %v527 = vrsqrt.pop %v526
        %v528 = vmul.f32 %v520, %v527
        %v530 = vlaneseq
        %v531 = vshrl.u32 %v530, 7
        %v532 = vsub.s32 0, %v531
        %v533 = vrot.slane %v512, %v532
        %v535 = vmul.f32 %v528, %v533
        %v537 = vlaneseq
        %v538 = vshrl.u32 %v537, 7
        %v539 = vsub.s32 0, %v538
        %v540 = vrot.slane %v513, %v539
        %v542 = vadd.f32 %v535, %v540
        %v543 = vld [vmem:[#allocation9] sm:$0xf]
        %v544 = vld [vmem:[#allocation9 + $0x4] sm:$0xf]
        %v545 = vld [vmem:[#allocation9 + $0x8] sm:$0xf]
        %v546 = vld [vmem:[#allocation9 + $0xc] sm:$0xf]
        %v547 = vpack.c.bf16 %v542, %v542
        %v548 = vld [vmem:[#allocation11] sm:$0x1]
        %v550 = vlaneseq
        %v551 = vshrl.u32 %v550, 7
        %v552 = vsub.s32 0, %v551
        %v553 = vrot.slane %v548, %v552
        %v559 = vunpack.c.l.b16 %v543
        %v560 = vunpack.c.l.b16 %v544
        %v561 = vunpack.c.l.b16 %v545
        %v562 = vunpack.c.l.b16 %v546
        %v563 = vpack.c.b16 %v560, %v559
        %v564 = vpack.c.b16 %v562, %v561
        %v568 = vsel %vm514, %v547, 0
        %570 = vmatprep.subr.bf16.mxu0 0
        %571 = vmatpush1.bf16.msra.mxu0 0
        %572 = vmatprep.subr.bf16.mxu0 0
        %573 = vmatpush1.bf16.msra.mxu0 0
        %574 = vmatprep.subr.bf16.mxu0 0
        %575 = vmatpush1.bf16.msra.mxu0 0
        %576 = vmatprep.subr.bf16.mxu0 0
        %577 = vmatpush1.bf16.msra.mxu0 0
        %578 = vmatprep.subr.bf16.mxu0 0
        %579 = vmatpush1.bf16.msra.mxu0 0
        %580 = vmatprep.subr.bf16.mxu0 0
        %581 = vmatpush1.bf16.msra.mxu0 0
        %582 = vmatprep.subr.bf16.mxu0 0
        %583 = vmatpush1.bf16.msra.mxu0 %v564
        %584 = vmatprep.subr.bf16.mxu0 0
        %585 = vmatpush1.bf16.msra.mxu0 %v563
        %586 = vmatprep.subr.bf16.mxu0 0
        %587 = vmatpush2.bf16.msra.mxu0 0
        %588 = vmatprep.subr.bf16.mxu0 0
        %589 = vmatpush2.bf16.msra.mxu0 0
        %590 = vmatprep.subr.bf16.mxu0 0
        %591 = vmatpush2.bf16.msra.mxu0 0
        %592 = vmatprep.subr.bf16.mxu0 0
        %593 = vmatpush2.bf16.msra.mxu0 0
        %594 = vmatprep.subr.bf16.mxu0 0
        %595 = vmatpush2.bf16.msra.mxu0 0
        %596 = vmatprep.subr.bf16.mxu0 0
        %597 = vmatpush2.bf16.msra.mxu0 0
        %598 = vmatprep.subr.bf16.mxu0 0
        %599 = vmatpush2.bf16.msra.mxu0 0
        %600 = vmatprep.subr.bf16.mxu0 0
        %601 = vmatpush2.bf16.msra.mxu0 0
        %602 = vmatprep.mubr.bf16.mxu0 0
        %603 = vmatmul.mubr.bf16.gmra.mxu0 %v568
        %v604 = vpop.f32.mrf.mxu0
        %v605 = vadd.f32 %v553, %v604
        %v606 = vpop.f32.mrf.mxu0
        %v607 = vpop.f32.mrf.mxu0
        %v608 = vpop.f32.mrf.mxu0
        %609 = vdwg.mxu0
        %v610 = vmul.f32 %v605, 0.35355338
        %v611 = vpack.c.bf16 %v610, %v610
        %v612 = vpack.c.bf16 %v605, %v605
        %614 = vrot.lane.b32.xlu0 %v612, 96
        %v615 = vpop.permute.xlu0 %614
        %vm616 = vcmask 64512
        %v618 = vsel %vm616, %v611, 0
        %v621 = vsel %vm616, %v615, 0
        %623 = vmatprep.subr.bf16.mxu0 0
        %624 = vmatpush1.bf16.xpose.msra.mxu0 0
        %625 = vmatprep.subr.bf16.mxu0 0
        %626 = vmatpush1.bf16.xpose.msra.mxu0 0
        %627 = vmatprep.subr.bf16.mxu0 0
        %628 = vmatpush1.bf16.xpose.msra.mxu0 0
        %629 = vmatprep.subr.bf16.mxu0 0
        %630 = vmatpush1.bf16.xpose.msra.mxu0 0
        %631 = vmatprep.subr.bf16.mxu0 0
        %632 = vmatpush1.bf16.xpose.msra.mxu0 0
        %633 = vmatprep.subr.bf16.mxu0 0
        %634 = vmatpush1.bf16.xpose.msra.mxu0 0
        %635 = vmatprep.subr.bf16.mxu0 0
        %636 = vmatpush1.bf16.xpose.msra.mxu0 0
        %637 = vmatprep.subr.bf16.mxu0 0
        %638 = vmatpush1.bf16.xpose.msra.mxu0 %v621
        %639 = vmatprep.subr.bf16.mxu0 0
        %640 = vmatpush2.bf16.xpose.msra.mxu0 0
        %641 = vmatprep.subr.bf16.mxu0 0
        %642 = vmatpush2.bf16.xpose.msra.mxu0 0
        %643 = vmatprep.subr.bf16.mxu0 0
        %644 = vmatpush2.bf16.xpose.msra.mxu0 0
        %645 = vmatprep.subr.bf16.mxu0 0
        %646 = vmatpush2.bf16.xpose.msra.mxu0 0
        %647 = vmatprep.subr.bf16.mxu0 0
        %648 = vmatpush2.bf16.xpose.msra.mxu0 0
        %649 = vmatprep.subr.bf16.mxu0 0
        %650 = vmatpush2.bf16.xpose.msra.mxu0 0
        %651 = vmatprep.subr.bf16.mxu0 0
        %652 = vmatpush2.bf16.xpose.msra.mxu0 0
        %653 = vmatprep.subr.bf16.mxu0 0
        %654 = vmatpush2.bf16.xpose.msra.mxu0 0
        %655 = vmatprep.mubr.bf16.mxu0 0
        %656 = vmatmul.mubr.bf16.gmra.mxu0 %v618
        %v657 = vpop.f32.mrf.mxu0
        %v658 = vadd.f32 0.0, %v657
        %v659 = vpop.f32.mrf.mxu0
        %v660 = vpop.f32.mrf.mxu0
        %v661 = vpop.f32.mrf.mxu0
        %662 = vdwg.mxu0
        %v663 = vsel %vm616, %v658, -inf
        %664 = vmax.xlane.f32.xlu0 %v663
        %v665 = vpop.xlane.xlu0 %664
        %v666 = vsub.f32 %v658, %v665
        %v667 = vmul.f32 %v666, 1.442695
        %v668 = vpow.pop %v667
        %v669 = vsel %vm616, %v668, 0.0
        %670 = vadd.xlane.f32.xlu0 %v669
        %v671 = vpop.xlane.xlu0 %670
        %v672 = vrcp.pop %v671
        %v673 = vmul.f32 %v668, %v672
        %v674 = vpack.c.bf16 %v673, %v673
        %675 = vrot.lane.b32.xlu0 %v612, 64
        %v676 = vpop.permute.xlu0 %675
        %v678 = vsel %vm616, %v674, 0
        %vm680 = vcmask 1043456
        %v682 = vsel %vm680, %v676, 0
        %684 = vmatprep.subr.bf16.mxu0 0
        %685 = vmatpush1.bf16.msra.mxu0 0
        %686 = vmatprep.subr.bf16.mxu0 0
        %687 = vmatpush1.bf16.msra.mxu0 0
        %688 = vmatprep.subr.bf16.mxu0 0
        %689 = vmatpush1.bf16.msra.mxu0 0
        %690 = vmatprep.subr.bf16.mxu0 0
        %691 = vmatpush1.bf16.msra.mxu0 0
        %692 = vmatprep.subr.bf16.mxu0 0
        %693 = vmatpush1.bf16.msra.mxu0 0
        %694 = vmatprep.subr.bf16.mxu0 0
        %695 = vmatpush1.bf16.msra.mxu0 0
        %696 = vmatprep.subr.bf16.mxu0 0
        %697 = vmatpush1.bf16.msra.mxu0 0
        %698 = vmatprep.subr.bf16.mxu0 0
        %699 = vmatpush1.bf16.msra.mxu0 %v682
        %700 = vmatprep.subr.bf16.mxu0 0
        %701 = vmatpush2.bf16.msra.mxu0 0
        %702 = vmatprep.subr.bf16.mxu0 0
        %703 = vmatpush2.bf16.msra.mxu0 0
        %704 = vmatprep.subr.bf16.mxu0 0
        %705 = vmatpush2.bf16.msra.mxu0 0
        %706 = vmatprep.subr.bf16.mxu0 0
        %707 = vmatpush2.bf16.msra.mxu0 0
        %708 = vmatprep.subr.bf16.mxu0 0
        %709 = vmatpush2.bf16.msra.mxu0 0
        %710 = vmatprep.subr.bf16.mxu0 0
        %711 = vmatpush2.bf16.msra.mxu0 0
        %712 = vmatprep.subr.bf16.mxu0 0
        %713 = vmatpush2.bf16.msra.mxu0 0
        %714 = vmatprep.subr.bf16.mxu0 0
        %715 = vmatpush2.bf16.msra.mxu0 0
        %716 = vmatprep.mubr.bf16.mxu0 0
        %717 = vmatmul.mubr.bf16.gmra.mxu0 %v678
        %v718 = vpop.f32.mrf.mxu0
        %v719 = vadd.f32 0.0, %v718
        %v720 = vpop.f32.mrf.mxu0
        %v721 = vpop.f32.mrf.mxu0
        %v722 = vpop.f32.mrf.mxu0
        %723 = vdwg.mxu0
        %724 = vst.msk [vmem:[#allocation2] sm:$0xff] %vm616, %v719
        %726 = vrot.lane.b32.xlu0 %v611, 120
        %v727 = vpop.permute.xlu0 %726
        %728 = vrot.lane.b32.xlu0 %v612, 88
        %v729 = vpop.permute.xlu0 %728
        %v731 = vsel %vm616, %v727, 0
        %v734 = vsel %vm616, %v729, 0
        %736 = vmatprep.subr.bf16.mxu0 0
        %737 = vmatpush1.bf16.xpose.msra.mxu0 0
        %738 = vmatprep.subr.bf16.mxu0 0
        %739 = vmatpush1.bf16.xpose.msra.mxu0 0
        %740 = vmatprep.subr.bf16.mxu0 0
        %741 = vmatpush1.bf16.xpose.msra.mxu0 0
        %742 = vmatprep.subr.bf16.mxu0 0
        %743 = vmatpush1.bf16.xpose.msra.mxu0 0
        %744 = vmatprep.subr.bf16.mxu0 0
        %745 = vmatpush1.bf16.xpose.msra.mxu0 0
        %746 = vmatprep.subr.bf16.mxu0 0
        %747 = vmatpush1.bf16.xpose.msra.mxu0 0
        %748 = vmatprep.subr.bf16.mxu0 0
        %749 = vmatpush1.bf16.xpose.msra.mxu0 0
        %750 = vmatprep.subr.bf16.mxu0 0
        %751 = vmatpush1.bf16.xpose.msra.mxu0 %v734
        %752 = vmatprep.subr.bf16.mxu0 0
        %753 = vmatpush2.bf16.xpose.msra.mxu0 0
        %754 = vmatprep.subr.bf16.mxu0 0
        %755 = vmatpush2.bf16.xpose.msra.mxu0 0
        %756 = vmatprep.subr.bf16.mxu0 0
        %757 = vmatpush2.bf16.xpose.msra.mxu0 0
        %758 = vmatprep.subr.bf16.mxu0 0
        %759 = vmatpush2.bf16.xpose.msra.mxu0 0
        %760 = vmatprep.subr.bf16.mxu0 0
        %761 = vmatpush2.bf16.xpose.msra.mxu0 0
        %762 = vmatprep.subr.bf16.mxu0 0
        %763 = vmatpush2.bf16.xpose.msra.mxu0 0
        %764 = vmatprep.subr.bf16.mxu0 0
        %765 = vmatpush2.bf16.xpose.msra.mxu0 0
        %766 = vmatprep.subr.bf16.mxu0 0
        %767 = vmatpush2.bf16.xpose.msra.mxu0 0
        %768 = vmatprep.mubr.bf16.mxu0 0
        %769 = vmatmul.mubr.bf16.gmra.mxu0 %v731
        %v770 = vpop.f32.mrf.mxu0
        %v771 = vadd.f32 0.0, %v770
        %v772 = vpop.f32.mrf.mxu0
        %v773 = vpop.f32.mrf.mxu0
        %v774 = vpop.f32.mrf.mxu0
        %775 = vdwg.mxu0
        %v776 = vsel %vm616, %v771, -inf
        %777 = vmax.xlane.f32.xlu0 %v776
        %v778 = vpop.xlane.xlu0 %777
        %v779 = vsub.f32 %v771, %v778
        %v780 = vmul.f32 %v779, 1.442695
        %v781 = vpow.pop %v780
        %v782 = vsel %vm616, %v781, 0.0
        %783 = vadd.xlane.f32.xlu0 %v782
        %v784 = vpop.xlane.xlu0 %783
        %v785 = vrcp.pop %v784
        %v786 = vmul.f32 %v781, %v785
        %v787 = vpack.c.bf16 %v786, %v786
        %788 = vrot.lane.b32.xlu0 %v612, 56
        %v789 = vpop.permute.xlu0 %788
        %v791 = vsel %vm616, %v787, 0
        %v794 = vsel %vm680, %v789, 0
        %796 = vmatprep.subr.bf16.mxu0 0
        %797 = vmatpush1.bf16.msra.mxu0 0
        %798 = vmatprep.subr.bf16.mxu0 0
        %799 = vmatpush1.bf16.msra.mxu0 0
        %800 = vmatprep.subr.bf16.mxu0 0
        %801 = vmatpush1.bf16.msra.mxu0 0
        %802 = vmatprep.subr.bf16.mxu0 0
        %803 = vmatpush1.bf16.msra.mxu0 0
        %804 = vmatprep.subr.bf16.mxu0 0
        %805 = vmatpush1.bf16.msra.mxu0 0
        %806 = vmatprep.subr.bf16.mxu0 0
        %807 = vmatpush1.bf16.msra.mxu0 0
        %808 = vmatprep.subr.bf16.mxu0 0
        %809 = vmatpush1.bf16.msra.mxu0 0
        %810 = vmatprep.subr.bf16.mxu0 0
        %811 = vmatpush1.bf16.msra.mxu0 %v794
        %812 = vmatprep.subr.bf16.mxu0 0
        %813 = vmatpush2.bf16.msra.mxu0 0
        %814 = vmatprep.subr.bf16.mxu0 0
        %815 = vmatpush2.bf16.msra.mxu0 0
        %816 = vmatprep.subr.bf16.mxu0 0
        %817 = vmatpush2.bf16.msra.mxu0 0
        %818 = vmatprep.subr.bf16.mxu0 0
        %819 = vmatpush2.bf16.msra.mxu0 0
        %820 = vmatprep.subr.bf16.mxu0 0
        %821 = vmatpush2.bf16.msra.mxu0 0
        %822 = vmatprep.subr.bf16.mxu0 0
        %823 = vmatpush2.bf16.msra.mxu0 0
        %824 = vmatprep.subr.bf16.mxu0 0
        %825 = vmatpush2.bf16.msra.mxu0 0
        %826 = vmatprep.subr.bf16.mxu0 0
        %827 = vmatpush2.bf16.msra.mxu0 0
        %828 = vmatprep.mubr.bf16.mxu0 0
        %829 = vmatmul.mubr.bf16.gmra.mxu0 %v791
        %v830 = vpop.f32.mrf.mxu0
        %v831 = vadd.f32 0.0, %v830
        %v832 = vpop.f32.mrf.mxu0
        %v833 = vpop.f32.mrf.mxu0
        %v834 = vpop.f32.mrf.mxu0
        %835 = vdwg.mxu0
        %837 = vrot.lane.b32.xlu0 %v831, 8
        %v838 = vpop.permute.xlu0 %837
        %vm840 = vcmask 130112
        %841 = vst.msk [vmem:[#allocation2] sm:$0xff] %vm840, %v838
        %842 = vrot.lane.b32.xlu0 %v611, 112
        %v843 = vpop.permute.xlu0 %842
        %844 = vrot.lane.b32.xlu0 %v612, 80
        %v845 = vpop.permute.xlu0 %844
        %v847 = vsel %vm616, %v843, 0
        %v850 = vsel %vm616, %v845, 0
        %852 = vmatprep.subr.bf16.mxu0 0
        %853 = vmatpush1.bf16.xpose.msra.mxu0 0
        %854 = vmatprep.subr.bf16.mxu0 0
        %855 = vmatpush1.bf16.xpose.msra.mxu0 0
        %856 = vmatprep.subr.bf16.mxu0 0
        %857 = vmatpush1.bf16.xpose.msra.mxu0 0
        %858 = vmatprep.subr.bf16.mxu0 0
        %859 = vmatpush1.bf16.xpose.msra.mxu0 0
        %860 = vmatprep.subr.bf16.mxu0 0
        %861 = vmatpush1.bf16.xpose.msra.mxu0 0
        %862 = vmatprep.subr.bf16.mxu0 0
        %863 = vmatpush1.bf16.xpose.msra.mxu0 0
        %864 = vmatprep.subr.bf16.mxu0 0
        %865 = vmatpush1.bf16.xpose.msra.mxu0 0
        %866 = vmatprep.subr.bf16.mxu0 0
        %867 = vmatpush1.bf16.xpose.msra.mxu0 %v850
        %868 = vmatprep.subr.bf16.mxu0 0
        %869 = vmatpush2.bf16.xpose.msra.mxu0 0
        %870 = vmatprep.subr.bf16.mxu0 0
        %871 = vmatpush2.bf16.xpose.msra.mxu0 0
        %872 = vmatprep.subr.bf16.mxu0 0
        %873 = vmatpush2.bf16.xpose.msra.mxu0 0
        %874 = vmatprep.subr.bf16.mxu0 0
        %875 = vmatpush2.bf16.xpose.msra.mxu0 0
        %876 = vmatprep.subr.bf16.mxu0 0
        %877 = vmatpush2.bf16.xpose.msra.mxu0 0
        %878 = vmatprep.subr.bf16.mxu0 0
        %879 = vmatpush2.bf16.xpose.msra.mxu0 0
        %880 = vmatprep.subr.bf16.mxu0 0
        %881 = vmatpush2.bf16.xpose.msra.mxu0 0
        %882 = vmatprep.subr.bf16.mxu0 0
        %883 = vmatpush2.bf16.xpose.msra.mxu0 0
        %884 = vmatprep.mubr.bf16.mxu0 0
        %885 = vmatmul.mubr.bf16.gmra.mxu0 %v847
        %v886 = vpop.f32.mrf.mxu0
        %v887 = vadd.f32 0.0, %v886
        %v888 = vpop.f32.mrf.mxu0
        %v889 = vpop.f32.mrf.mxu0
        %v890 = vpop.f32.mrf.mxu0
        %891 = vdwg.mxu0
        %v892 = vsel %vm616, %v887, -inf
        %893 = vmax.xlane.f32.xlu0 %v892
        %v894 = vpop.xlane.xlu0 %893
        %v895 = vsub.f32 %v887, %v894
        %v896 = vmul.f32 %v895, 1.442695
        %v897 = vpow.pop %v896
        %v898 = vsel %vm616, %v897, 0.0
        %899 = vadd.xlane.f32.xlu0 %v898
        %v900 = vpop.xlane.xlu0 %899
        %v901 = vrcp.pop %v900
        %v902 = vmul.f32 %v897, %v901
        %v903 = vpack.c.bf16 %v902, %v902
        %904 = vrot.lane.b32.xlu0 %v612, 48
        %v905 = vpop.permute.xlu0 %904
        %v907 = vsel %vm616, %v903, 0
        %v910 = vsel %vm680, %v905, 0
        %912 = vmatprep.subr.bf16.mxu0 0
        %913 = vmatpush1.bf16.msra.mxu0 0
        %914 = vmatprep.subr.bf16.mxu0 0
        %915 = vmatpush1.bf16.msra.mxu0 0
        %916 = vmatprep.subr.bf16.mxu0 0
        %917 = vmatpush1.bf16.msra.mxu0 0
        %918 = vmatprep.subr.bf16.mxu0 0
        %919 = vmatpush1.bf16.msra.mxu0 0
        %920 = vmatprep.subr.bf16.mxu0 0
        %921 = vmatpush1.bf16.msra.mxu0 0
        %922 = vmatprep.subr.bf16.mxu0 0
        %923 = vmatpush1.bf16.msra.mxu0 0
        %924 = vmatprep.subr.bf16.mxu0 0
        %925 = vmatpush1.bf16.msra.mxu0 0
        %926 = vmatprep.subr.bf16.mxu0 0
        %927 = vmatpush1.bf16.msra.mxu0 %v910
        %928 = vmatprep.subr.bf16.mxu0 0
        %929 = vmatpush2.bf16.msra.mxu0 0
        %930 = vmatprep.subr.bf16.mxu0 0
        %931 = vmatpush2.bf16.msra.mxu0 0
        %932 = vmatprep.subr.bf16.mxu0 0
        %933 = vmatpush2.bf16.msra.mxu0 0
        %934 = vmatprep.subr.bf16.mxu0 0
        %935 = vmatpush2.bf16.msra.mxu0 0
        %936 = vmatprep.subr.bf16.mxu0 0
        %937 = vmatpush2.bf16.msra.mxu0 0
        %938 = vmatprep.subr.bf16.mxu0 0
        %939 = vmatpush2.bf16.msra.mxu0 0
        %940 = vmatprep.subr.bf16.mxu0 0
        %941 = vmatpush2.bf16.msra.mxu0 0
        %942 = vmatprep.subr.bf16.mxu0 0
        %943 = vmatpush2.bf16.msra.mxu0 0
        %944 = vmatprep.mubr.bf16.mxu0 0
        %945 = vmatmul.mubr.bf16.gmra.mxu0 %v907
        %v946 = vpop.f32.mrf.mxu0
        %v947 = vadd.f32 0.0, %v946
        %v948 = vpop.f32.mrf.mxu0
        %v949 = vpop.f32.mrf.mxu0
        %v950 = vpop.f32.mrf.mxu0
        %951 = vdwg.mxu0
        %953 = vrot.lane.b32.xlu0 %v947, 16
        %v954 = vpop.permute.xlu0 %953
        %vm956 = vcmask 195712
        %957 = vst.msk [vmem:[#allocation2] sm:$0xff] %vm956, %v954
        %958 = vrot.lane.b32.xlu0 %v611, 104
        %v959 = vpop.permute.xlu0 %958
        %960 = vrot.lane.b32.xlu0 %v612, 72
        %v961 = vpop.permute.xlu0 %960
        %v963 = vsel %vm616, %v959, 0
        %v966 = vsel %vm616, %v961, 0
        %968 = vmatprep.subr.bf16.mxu0 0
        %969 = vmatpush1.bf16.xpose.msra.mxu0 0
        %970 = vmatprep.subr.bf16.mxu0 0
        %971 = vmatpush1.bf16.xpose.msra.mxu0 0
        %972 = vmatprep.subr.bf16.mxu0 0
        %973 = vmatpush1.bf16.xpose.msra.mxu0 0
        %974 = vmatprep.subr.bf16.mxu0 0
        %975 = vmatpush1.bf16.xpose.msra.mxu0 0
        %976 = vmatprep.subr.bf16.mxu0 0
        %977 = vmatpush1.bf16.xpose.msra.mxu0 0
        %978 = vmatprep.subr.bf16.mxu0 0
        %979 = vmatpush1.bf16.xpose.msra.mxu0 0
        %980 = vmatprep.subr.bf16.mxu0 0
        %981 = vmatpush1.bf16.xpose.msra.mxu0 0
        %982 = vmatprep.subr.bf16.mxu0 0
        %983 = vmatpush1.bf16.xpose.msra.mxu0 %v966
        %984 = vmatprep.subr.bf16.mxu0 0
        %985 = vmatpush2.bf16.xpose.msra.mxu0 0
        %986 = vmatprep.subr.bf16.mxu0 0
        %987 = vmatpush2.bf16.xpose.msra.mxu0 0
        %988 = vmatprep.subr.bf16.mxu0 0
        %989 = vmatpush2.bf16.xpose.msra.mxu0 0
        %990 = vmatprep.subr.bf16.mxu0 0
        %991 = vmatpush2.bf16.xpose.msra.mxu0 0
        %992 = vmatprep.subr.bf16.mxu0 0
        %993 = vmatpush2.bf16.xpose.msra.mxu0 0
        %994 = vmatprep.subr.bf16.mxu0 0
        %995 = vmatpush2.bf16.xpose.msra.mxu0 0
        %996 = vmatprep.subr.bf16.mxu0 0
        %997 = vmatpush2.bf16.xpose.msra.mxu0 0
        %998 = vmatprep.subr.bf16.mxu0 0
        %999 = vmatpush2.bf16.xpose.msra.mxu0 0
        %1000 = vmatprep.mubr.bf16.mxu0 0
        %1001 = vmatmul.mubr.bf16.gmra.mxu0 %v963
        %v1002 = vpop.f32.mrf.mxu0
        %v1003 = vadd.f32 0.0, %v1002
        %v1004 = vpop.f32.mrf.mxu0
        %v1005 = vpop.f32.mrf.mxu0
        %v1006 = vpop.f32.mrf.mxu0
        %1007 = vdwg.mxu0
        %v1008 = vsel %vm616, %v1003, -inf
        %1009 = vmax.xlane.f32.xlu0 %v1008
        %v1010 = vpop.xlane.xlu0 %1009
        %v1011 = vsub.f32 %v1003, %v1010
        %v1012 = vmul.f32 %v1011, 1.442695
        %v1013 = vpow.pop %v1012
        %v1014 = vsel %vm616, %v1013, 0.0
        %1015 = vadd.xlane.f32.xlu0 %v1014
        %v1016 = vpop.xlane.xlu0 %1015
        %v1017 = vrcp.pop %v1016
        %v1018 = vmul.f32 %v1013, %v1017
        %v1019 = vpack.c.bf16 %v1018, %v1018
        %1020 = vrot.lane.b32.xlu0 %v612, 40
        %v1021 = vpop.permute.xlu0 %1020
        %v1023 = vsel %vm616, %v1019, 0
        %v1026 = vsel %vm680, %v1021, 0
        %1028 = vmatprep.subr.bf16.mxu0 0
        %1029 = vmatpush1.bf16.msra.mxu0 0
        %1030 = vmatprep.subr.bf16.mxu0 0
        %1031 = vmatpush1.bf16.msra.mxu0 0
        %1032 = vmatprep.subr.bf16.mxu0 0
        %1033 = vmatpush1.bf16.msra.mxu0 0
        %1034 = vmatprep.subr.bf16.mxu0 0
        %1035 = vmatpush1.bf16.msra.mxu0 0
        %1036 = vmatprep.subr.bf16.mxu0 0
        %1037 = vmatpush1.bf16.msra.mxu0 0
        %1038 = vmatprep.subr.bf16.mxu0 0
        %1039 = vmatpush1.bf16.msra.mxu0 0
        %1040 = vmatprep.subr.bf16.mxu0 0
        %1041 = vmatpush1.bf16.msra.mxu0 0
        %1042 = vmatprep.subr.bf16.mxu0 0
        %1043 = vmatpush1.bf16.msra.mxu0 %v1026
        %1044 = vmatprep.subr.bf16.mxu0 0
        %1045 = vmatpush2.bf16.msra.mxu0 0
        %1046 = vmatprep.subr.bf16.mxu0 0
        %1047 = vmatpush2.bf16.msra.mxu0 0
        %1048 = vmatprep.subr.bf16.mxu0 0
        %1049 = vmatpush2.bf16.msra.mxu0 0
        %1050 = vmatprep.subr.bf16.mxu0 0
        %1051 = vmatpush2.bf16.msra.mxu0 0
        %1052 = vmatprep.subr.bf16.mxu0 0
        %1053 = vmatpush2.bf16.msra.mxu0 0
        %1054 = vmatprep.subr.bf16.mxu0 0
        %1055 = vmatpush2.bf16.msra.mxu0 0
        %1056 = vmatprep.subr.bf16.mxu0 0
        %1057 = vmatpush2.bf16.msra.mxu0 0
        %1058 = vmatprep.subr.bf16.mxu0 0
        %1059 = vmatpush2.bf16.msra.mxu0 0
        %1060 = vmatprep.mubr.bf16.mxu0 0
        %1061 = vmatmul.mubr.bf16.gmra.mxu0 %v1023
        %v1062 = vpop.f32.mrf.mxu0
        %v1063 = vadd.f32 0.0, %v1062
        %v1064 = vpop.f32.mrf.mxu0
        %v1065 = vpop.f32.mrf.mxu0
        %v1066 = vpop.f32.mrf.mxu0
        %1067 = vdwg.mxu0
        %1069 = vrot.lane.b32.xlu0 %v1063, 24
        %v1070 = vpop.permute.xlu0 %1069
        %vm1072 = vcmask 261312
        %1073 = vst.msk [vmem:[#allocation2] sm:$0xff] %vm1072, %v1070
        %v1074 = vld [vmem:[#allocation2] sm:$0xff]
        %v1075 = vld [vmem:[#allocation12] sm:$0xf]
        %v1076 = vld [vmem:[#allocation12 + $0x4] sm:$0xf]
        %v1077 = vld [vmem:[#allocation12 + $0x8] sm:$0xf]
        %v1078 = vld [vmem:[#allocation12 + $0xc] sm:$0xf]
        %v1079 = vpack.c.bf16 %v1074, %v1074
        %v1080 = vld [vmem:[#allocation14] sm:$0x1]
        %v1082 = vlaneseq
        %v1083 = vshrl.u32 %v1082, 7
        %v1084 = vsub.s32 0, %v1083
        %v1085 = vrot.slane %v1080, %v1084
        %v1091 = vunpack.c.l.b16 %v1075
        %v1092 = vunpack.c.l.b16 %v1076
        %v1093 = vunpack.c.l.b16 %v1077
        %v1094 = vunpack.c.l.b16 %v1078
        %v1095 = vpack.c.b16 %v1092, %v1091
        %v1096 = vpack.c.b16 %v1094, %v1093
        %v1100 = vsel %vm514, %v1079, 0
        %1102 = vmatprep.subr.bf16.mxu0 0
        %1103 = vmatpush1.bf16.msra.mxu0 0
        %1104 = vmatprep.subr.bf16.mxu0 0
        %1105 = vmatpush1.bf16.msra.mxu0 0
        %1106 = vmatprep.subr.bf16.mxu0 0
        %1107 = vmatpush1.bf16.msra.mxu0 0
        %1108 = vmatprep.subr.bf16.mxu0 0
        %1109 = vmatpush1.bf16.msra.mxu0 0
        %1110 = vmatprep.subr.bf16.mxu0 0
        %1111 = vmatpush1.bf16.msra.mxu0 0
        %1112 = vmatprep.subr.bf16.mxu0 0
        %1113 = vmatpush1.bf16.msra.mxu0 0
        %1114 = vmatprep.subr.bf16.mxu0 0
        %1115 = vmatpush1.bf16.msra.mxu0 %v1096
        %1116 = vmatprep.subr.bf16.mxu0 0
        %1117 = vmatpush1.bf16.msra.mxu0 %v1095
        %1118 = vmatprep.subr.bf16.mxu0 0
        %1119 = vmatpush2.bf16.msra.mxu0 0
        %1120 = vmatprep.subr.bf16.mxu0 0
        %1121 = vmatpush2.bf16.msra.mxu0 0
        %1122 = vmatprep.subr.bf16.mxu0 0
        %1123 = vmatpush2.bf16.msra.mxu0 0
        %1124 = vmatprep.subr.bf16.mxu0 0
        %1125 = vmatpush2.bf16.msra.mxu0 0
        %1126 = vmatprep.subr.bf16.mxu0 0
        %1127 = vmatpush2.bf16.msra.mxu0 0
        %1128 = vmatprep.subr.bf16.mxu0 0
        %1129 = vmatpush2.bf16.msra.mxu0 0
        %1130 = vmatprep.subr.bf16.mxu0 0
        %1131 = vmatpush2.bf16.msra.mxu0 0
        %1132 = vmatprep.subr.bf16.mxu0 0
        %1133 = vmatpush2.bf16.msra.mxu0 0
        %1134 = vmatprep.mubr.bf16.mxu0 0
        %1135 = vmatmul.mubr.bf16.gmra.mxu0 %v1100
        %v1136 = vpop.f32.mrf.mxu0
        %v1137 = vadd.f32 %v1085, %v1136
        %v1138 = vpop.f32.mrf.mxu0
        %v1139 = vpop.f32.mrf.mxu0
        %v1140 = vpop.f32.mrf.mxu0
        %1141 = vdwg.mxu0
        %v1142 = vmax.f32 %v1137, 0.0
        %v1143 = vld [vmem:[#allocation15] sm:$0xf]
        %v1144 = vld [vmem:[#allocation15 + $0x4] sm:$0xf]
        %v1145 = vld [vmem:[#allocation15 + $0x8] sm:$0xf]
        %v1146 = vld [vmem:[#allocation15 + $0xc] sm:$0xf]
        %v1147 = vld [vmem:[#allocation17] sm:$0xf]
        %v1148 = vld [vmem:[#allocation17 + $0x4] sm:$0xf]
        %v1149 = vld [vmem:[#allocation17 + $0x8] sm:$0xf]
        %v1150 = vld [vmem:[#allocation17 + $0xc] sm:$0xf]
        %v1151 = vld [vmem:[%s9] sm:$0xf]
        %v1152 = vld [vmem:[%s9 + $0x4] sm:$0xf]
        %v1153 = vld [vmem:[%s9 + $0x8] sm:$0xf]
        %v1154 = vld [vmem:[%s9 + $0xc] sm:$0xf]
        %v1155 = vld [vmem:[%s10] sm:$0x1]
        %v1156 = vpack.c.bf16 %v1142, %v1142
        %v1161 = vunpack.c.l.b16 %v1143
        %v1162 = vunpack.c.l.b16 %v1144
        %v1163 = vunpack.c.l.b16 %v1145
        %v1164 = vunpack.c.l.b16 %v1146
        %v1165 = vpack.c.b16 %v1162, %v1161
        %v1166 = vpack.c.b16 %v1164, %v1163
        %v1170 = vsel %vm514, %v1156, 0
        %1172 = vmatprep.subr.bf16.mxu0 0
        %1173 = vmatpush1.bf16.msra.mxu0 0
        %1174 = vmatprep.subr.bf16.mxu0 0
        %1175 = vmatpush1.bf16.msra.mxu0 0
        %1176 = vmatprep.subr.bf16.mxu0 0
        %1177 = vmatpush1.bf16.msra.mxu0 0
        %1178 = vmatprep.subr.bf16.mxu0 0
        %1179 = vmatpush1.bf16.msra.mxu0 0
        %1180 = vmatprep.subr.bf16.mxu0 0
        %1181 = vmatpush1.bf16.msra.mxu0 0
        %1182 = vmatprep.subr.bf16.mxu0 0
        %1183 = vmatpush1.bf16.msra.mxu0 0
        %1184 = vmatprep.subr.bf16.mxu0 0
        %1185 = vmatpush1.bf16.msra.mxu0 %v1166
        %1186 = vmatprep.subr.bf16.mxu0 0
        %1187 = vmatpush1.bf16.msra.mxu0 %v1165
        %1188 = vmatprep.subr.bf16.mxu0 0
        %1189 = vmatpush2.bf16.msra.mxu0 0
        %1190 = vmatprep.subr.bf16.mxu0 0
        %1191 = vmatpush2.bf16.msra.mxu0 0
        %1192 = vmatprep.subr.bf16.mxu0 0
        %1193 = vmatpush2.bf16.msra.mxu0 0
        %1194 = vmatprep.subr.bf16.mxu0 0
        %1195 = vmatpush2.bf16.msra.mxu0 0
        %1196 = vmatprep.subr.bf16.mxu0 0
        %1197 = vmatpush2.bf16.msra.mxu0 0
        %1198 = vmatprep.subr.bf16.mxu0 0
        %1199 = vmatpush2.bf16.msra.mxu0 0
        %1200 = vmatprep.subr.bf16.mxu0 0
        %1201 = vmatpush2.bf16.msra.mxu0 0
        %1202 = vmatprep.subr.bf16.mxu0 0
        %1203 = vmatpush2.bf16.msra.mxu0 0
        %1204 = vmatprep.mubr.bf16.mxu0 0
        %1205 = vmatmul.mubr.bf16.gmra.mxu0 %v1170
        %v1206 = vpop.f32.mrf.mxu0
        %v1207 = vadd.f32 0.0, %v1206
        %v1208 = vpop.f32.mrf.mxu0
        %v1209 = vpop.f32.mrf.mxu0
        %v1210 = vpop.f32.mrf.mxu0
        %1211 = vdwg.mxu0
        %v1212 = vpack.c.bf16 %v511, %v511
        %v1217 = vunpack.c.l.b16 %v1147
        %v1218 = vunpack.c.l.b16 %v1148
        %v1219 = vunpack.c.l.b16 %v1149
        %v1220 = vunpack.c.l.b16 %v1150
        %v1221 = vpack.c.b16 %v1218, %v1217
        %v1222 = vpack.c.b16 %v1220, %v1219
        %v1226 = vsel %vm514, %v1212, 0
        %1228 = vmatprep.subr.bf16.mxu0 0
        %1229 = vmatpush1.bf16.msra.mxu0 0
        %1230 = vmatprep.subr.bf16.mxu0 0
        %1231 = vmatpush1.bf16.msra.mxu0 0
        %1232 = vmatprep.subr.bf16.mxu0 0
        %1233 = vmatpush1.bf16.msra.mxu0 0
        %1234 = vmatprep.subr.bf16.mxu0 0
        %1235 = vmatpush1.bf16.msra.mxu0 0
        %1236 = vmatprep.subr.bf16.mxu0 0
        %1237 = vmatpush1.bf16.msra.mxu0 0
        %1238 = vmatprep.subr.bf16.mxu0 0
        %1239 = vmatpush1.bf16.msra.mxu0 0
        %1240 = vmatprep.subr.bf16.mxu0 0
        %1241 = vmatpush1.bf16.msra.mxu0 %v1222
        %1242 = vmatprep.subr.bf16.mxu0 0
        %1243 = vmatpush1.bf16.msra.mxu0 %v1221
        %1244 = vmatprep.subr.bf16.mxu0 0
        %1245 = vmatpush2.bf16.msra.mxu0 0
        %1246 = vmatprep.subr.bf16.mxu0 0
        %1247 = vmatpush2.bf16.msra.mxu0 0
        %1248 = vmatprep.subr.bf16.mxu0 0
        %1249 = vmatpush2.bf16.msra.mxu0 0
        %1250 = vmatprep.subr.bf16.mxu0 0
        %1251 = vmatpush2.bf16.msra.mxu0 0
        %1252 = vmatprep.subr.bf16.mxu0 0
        %1253 = vmatpush2.bf16.msra.mxu0 0
        %1254 = vmatprep.subr.bf16.mxu0 0
        %1255 = vmatpush2.bf16.msra.mxu0 0
        %1256 = vmatprep.subr.bf16.mxu0 0
        %1257 = vmatpush2.bf16.msra.mxu0 0
        %1258 = vmatprep.subr.bf16.mxu0 0
        %1259 = vmatpush2.bf16.msra.mxu0 0
        %1260 = vmatprep.mubr.bf16.mxu0 0
        %1261 = vmatmul.mubr.bf16.gmra.mxu0 %v1226
        %v1262 = vpop.f32.mrf.mxu0
        %v1263 = vadd.f32 0.0, %v1262
        %v1264 = vpop.f32.mrf.mxu0
        %v1265 = vpop.f32.mrf.mxu0
        %v1266 = vpop.f32.mrf.mxu0
        %1267 = vdwg.mxu0
        %v1268 = vadd.f32 %v1207, %v1263
        %v1269 = vxor.u32 %v1268, 2147483648
        %v1270 = vmul.f32 %v1269, 1.442695
        %v1271 = vpow.pop %v1270
        %v1272 = vadd.f32 %v1271, 1.0
        %v1273 = vrcp.pop %v1272
        %v1274 = vmul.f32 1.0, %v1273
        %v1276 = vlaneseq
        %v1277 = vshrl.u32 %v1276, 7
        %v1278 = vsub.s32 0, %v1277
        %v1279 = vrot.slane %v1155, %v1278
        %1280 = vrot.lane.b32.xlu0 %v1279, 32
        %v1281 = vpop.permute.xlu0 %1280
        %v1283 = vsub.f32 %v1268, %v1281
        %v1284 = vxor.u32 %v1283, 2147483648
        %v1285 = vmul.f32 %v1284, 1.442695
        %v1286 = vpow.pop %v1285
        %v1287 = vadd.f32 %v1286, 1.0
        %v1288 = vrcp.pop %v1287
        %v1289 = vmul.f32 1.0, %v1288
        %v1290 = vmul.f32 %v1274, %v511
        %v1291 = vpack.c.bf16 %v1290, %v1290
        %v1296 = vunpack.c.l.b16 %v1151
        %v1297 = vunpack.c.l.b16 %v1152
        %v1298 = vunpack.c.l.b16 %v1153
        %v1299 = vunpack.c.l.b16 %v1154
        %v1300 = vpack.c.b16 %v1297, %v1296
        %v1301 = vpack.c.b16 %v1299, %v1298
        %v1305 = vsel %vm514, %v1291, 0
        %1307 = vmatprep.subr.bf16.mxu0 0
        %1308 = vmatpush1.bf16.msra.mxu0 0
        %1309 = vmatprep.subr.bf16.mxu0 0
        %1310 = vmatpush1.bf16.msra.mxu0 0
        %1311 = vmatprep.subr.bf16.mxu0 0
        %1312 = vmatpush1.bf16.msra.mxu0 0
        %1313 = vmatprep.subr.bf16.mxu0 0
        %1314 = vmatpush1.bf16.msra.mxu0 0
        %1315 = vmatprep.subr.bf16.mxu0 0
        %1316 = vmatpush1.bf16.msra.mxu0 0
        %1317 = vmatprep.subr.bf16.mxu0 0
        %1318 = vmatpush1.bf16.msra.mxu0 0
        %1319 = vmatprep.subr.bf16.mxu0 0
        %1320 = vmatpush1.bf16.msra.mxu0 %v1301
        %1321 = vmatprep.subr.bf16.mxu0 0
        %1322 = vmatpush1.bf16.msra.mxu0 %v1300
        %1323 = vmatprep.subr.bf16.mxu0 0
        %1324 = vmatpush2.bf16.msra.mxu0 0
        %1325 = vmatprep.subr.bf16.mxu0 0
        %1326 = vmatpush2.bf16.msra.mxu0 0
        %1327 = vmatprep.subr.bf16.mxu0 0
        %1328 = vmatpush2.bf16.msra.mxu0 0
        %1329 = vmatprep.subr.bf16.mxu0 0
        %1330 = vmatpush2.bf16.msra.mxu0 0
        %1331 = vmatprep.subr.bf16.mxu0 0
        %1332 = vmatpush2.bf16.msra.mxu0 0
        %1333 = vmatprep.subr.bf16.mxu0 0
        %1334 = vmatpush2.bf16.msra.mxu0 0
        %1335 = vmatprep.subr.bf16.mxu0 0
        %1336 = vmatpush2.bf16.msra.mxu0 0
        %1337 = vmatprep.subr.bf16.mxu0 0
        %1338 = vmatpush2.bf16.msra.mxu0 0
        %1339 = vmatprep.mubr.bf16.mxu0 0
        %1340 = vmatmul.mubr.bf16.gmra.mxu0 %v1305
        %v1341 = vpop.f32.mrf.mxu0
        %v1342 = vadd.f32 0.0, %v1341
        %v1343 = vpop.f32.mrf.mxu0
        %v1344 = vpop.f32.mrf.mxu0
        %v1345 = vpop.f32.mrf.mxu0
        %1346 = vdwg.mxu0
        %1348 = vrot.lane.b32.xlu0 %v1342, 64
        %v1349 = vpop.permute.xlu0 %1348
        %v1351 = vadd.f32 %v1207, %v1349
        %v1352 = vtanh.pop %v1351
        %v1353 = vsub.f32 1.0, %v1289
        %1355 = vrot.lane.b32.xlu0 %v511, 32
        %v1356 = vpop.permute.xlu0 %1355
        %v1358 = vmul.f32 %v1353, %v1356
        %1360 = vrot.lane.b32.xlu0 %v1352, 96
        %v1361 = vpop.permute.xlu0 %1360
        %v1363 = vmul.f32 %v1289, %v1361
        %v1364 = vadd.f32 %v1358, %v1363
        %1366 = vrot.lane.b32.xlu0 %v1364, 96
        %v1367 = vpop.permute.xlu0 %1366
        %1369 = vst.msk [vmem:[%s509] sm:$0xff] %vm514, %v1367
        %s1370 = sand.u32 %s276, 1
        %s1371 = scalar_lea.sflag [#allocation5], %s1370
        %s1372 = sand.u32 %s276, 1
        %s1373 = smul.addr %s1372, 8
        %s1374 = scalar_lea.vmem [#allocation18], %s1373
        // Predicated region
        $region101: #{tpu_custom_call.1} parent=63 // pred_check
          %p1375 = pneg %p286
        $region102: #{tpu_custom_call.1} parent=63 // pred_check_branch
          %1377 = sbr.rel (%p1375) target = $region104
        $region103: #{tpu_custom_call.1} parent=63 // pred_region
          %s1379 = ssub.s32 128, 128
          %1380 = vsyncadd %s1371, %s1379
          %s1381 = smul.addr %s32, 128
          %s1382 = scalar_lea.hbm %s11, %s1381
          %s1384 = sshll.u32 %s1374, 4
          %s1385 = int_to_ptr.vmem [resolvable:$true] %s1384
          %1387 = dma.vmem_to_hbm [thread:$0]  %s1385, 128, %s1382, %s1371
        $region104: #{tpu_custom_call.1} parent=63 // pred_fallthru
          _
      $region64: #{tpu_custom_call.1} parent=5 // pred_fallthru
        _
      %p1388 = scmp.le.s32.totalorder 2, %s27
      // Predicated region
      $region105: #{tpu_custom_call.1} parent=5 // pred_check
        %p1389 = pneg %p1388
      $region106: #{tpu_custom_call.1} parent=5 // pred_check_branch
        %1391 = sbr.rel (%p1389) target = $region108
      $region107: #{tpu_custom_call.1} parent=5 // pred_region
        %s1392 = ssub.s32 %s27, 2
        // Predicated region
        $region109: #{tpu_custom_call.1} parent=107 // pred_check
          %p1393 = pneg %p292
        $region110: #{tpu_custom_call.1} parent=107 // pred_check_branch
          %1395 = sbr.rel (%p1393) target = $region112
        $region111: #{tpu_custom_call.1} parent=107 // pred_region
          %s1396 = sand.u32 %s277, 1
          %s1397 = scalar_lea.sflag [#allocation5], %s1396
          %s1398 = sand.u32 %s277, 1
          %s1399 = smul.addr %s1398, 8
          %s1400 = scalar_lea.vmem [#allocation18], %s1399
          %1401 = dma.done %s1397, 128
        $region112: #{tpu_custom_call.1} parent=107 // pred_fallthru
          _
      $region108: #{tpu_custom_call.1} parent=5 // pred_fallthru
        _
    $region6: #{tpu_custom_call.1} parent=1 // loop_footer
      %s31 = sadd.s32 1, %s27
    $region7: #{tpu_custom_call.1} parent=1 // loop_footer_branch
      %26 = sbr.rel target = $region3
    $region8: #{tpu_custom_call.1} parent=1 // loop_exit
      _
    %1402 = vsyncpa [#allocation4], 1
    %s1403 = scalar_lea.sflag [#allocation4], 1
    %1404 = vsyncpa %s1403, 1
    %1405 = vsyncpa [#allocation7], 1
    %1406 = vsyncpa [#allocation10], 1
    %1407 = vsyncpa [#allocation13], 1
    %1408 = vsyncpa [#allocation16], 1
    %1409 = vsyncpa [#allocation5], 1
    %s1410 = scalar_lea.sflag [#allocation5], 1
    %1411 = vsyncpa %s1410, 1

</llo_original>
